<compile_context>
chip_gen: v7x
topology: tpu7x:2x2x1
jax: 0.10.0
libtpu: 0.0.40
codegen_flags: <defaults>
</compile_context>

<pallas_src>
import math
from functools import partial

import jax
import jax.numpy as jnp
from jax.experimental import pallas as pl
from jax.experimental.pallas import tpu as pltpu


def _vmem_limit_bytes(workset_bytes: int) -> int:
    """Generation-aware scoped-VMEM cap.

    Leaves ~14 MiB of headroom under the physical per-core VMEM (64 MiB v7x,
    128 MiB v5e/v6e) for the double-buffered BlockSpec windows and internal
    scratch, while letting large worksets grow past the 16/32 MiB defaults.
    """
    try:
        cap = int(getattr(pltpu.get_tpu_info(), "vmem_capacity_bytes", 64 << 20))
    except Exception:
        cap = 64 << 20
    ceiling = max(32 << 20, cap - (14 << 20))
    want = max(32 << 20, int(1.5 * workset_bytes))
    return int(min(ceiling, want))


# ----------------------------------------------------------------------------
# Kernel 1: fused DPC-KNN clustering scores for all distinct k (per batch b).
# Output: lane-dense (1, Kd, N); row r corresponds to ks_distinct[r].
# ----------------------------------------------------------------------------
def _dpc_score_kernel(x_ref, score_ref, *, ks_distinct):
    xb = x_ref[0]                                          # (N, C) bf16
    N, C = xb.shape

    # Squared pairwise distances: gram on the MXU (bf16 operands, f32 acc;
    # ordering-only downstream), squared norms accumulated in f32 on the VPU.
    # NOTE: this is the standard flash-attn 'bqd,bkd->bqk' contraction; if
    # tuning on v6e, verify via pl.lower_as_mlir that no explicit (N,C)->(C,N)
    # XLU transpose is materialised (if so, pass a precomputed x^T block).
    sq = jnp.sum(jnp.square(xb.astype(jnp.float32)), axis=-1, keepdims=True)  # (N,1)
    gram = jax.lax.dot_general(xb, xb, (((1,), (1,)), ((), ())),
                               preferred_element_type=jnp.float32)            # (N,N)
    d2 = jnp.maximum(sq + jnp.transpose(sq) - 2.0 * gram, 0.0)

    # Packed (value | column) keys built ONCE.  d2 >= 0, so the f32 bit pattern
    # orders identically as int32; the low idx_bits carry the column index
    # (ties break on lowest column; selected values lose ~idx_bits mantissa
    # bits -- a ~1e-4 relative underestimate of the k-NN sum).
    col = jax.lax.broadcasted_iota(jnp.int32, (N, N), 1)
    idx_bits = max(1, (N - 1).bit_length())
    low_mask = (1 << idx_bits) - 1
    hi_mask = jnp.int32(~low_mask)
    int_max = jnp.int32(2147483647)
    keys = jnp.bitwise_or(jnp.bitwise_and(pltpu.bitcast(d2, jnp.int32), hi_mask), col)

    d2_max = jnp.max(d2)
    kmax = max(ks_distinct)
    acc = jnp.zeros((N, 1), jnp.float32)
    rows = []
    for step in range(1, kmax + 1):                        # kmax is a small static int
        kmin = jnp.min(keys, axis=-1, keepdims=True)       # (N,1): row min + its column
        acc = acc + pltpu.bitcast(jnp.bitwise_and(kmin, hi_mask), jnp.float32)
        if step < kmax:
            keys = jnp.where(keys == kmin, int_max, keys)  # retire the selected entry
        if step in ks_distinct:
            # density = exp(-mean of k smallest dist^2), dist^2 = d2 / C.
            density = jnp.exp(-acc / jnp.float32(step * C))            # (N,1)
            # TODO(synk): reference adds torch.rand(...)*1e-6 to density as a
            # stochastic tie-breaker; omitted (only affects exact-tie ordering).
            dens_row = jnp.transpose(density)                          # (1,N)
            mask = dens_row > density                                  # strictly denser
            parent_d2 = jnp.min(jnp.where(mask, d2, d2_max), axis=-1, keepdims=True)
            parent_dist = jnp.sqrt(parent_d2) * jnp.float32(1.0 / math.sqrt(C))
            rows.append(jnp.transpose(parent_dist * density))          # (1,N) lane-dense
    score_ref[0] = jnp.concatenate(rows, axis=0)           # (Kd, N)


def dpc_scores_pallas(x_bf16, ks_distinct):
    B, N, C = x_bf16.shape
    kd = len(ks_distinct)
    workset = 16 * N * N + 8 * N * C + 16 * N
    # TODO(synk): for N >= ~900 add a query-row grid axis (grid=(B, N//TQ)) so
    # the N^2 slab stays inside v7x's 64 MiB VMEM and both TCs are fed at B==1.
    return pl.pallas_call(
        partial(_dpc_score_kernel, ks_distinct=tuple(ks_distinct)),
        out_shape=jax.ShapeDtypeStruct((B, kd, N), jnp.float32),
        grid=(B,),
        in_specs=[pl.BlockSpec((1, N, C), lambda b: (b, 0, 0))],
        out_specs=pl.BlockSpec((1, kd, N), lambda b: (b, 0, 0)),
        compiler_params=pltpu.CompilerParams(
            dimension_semantics=("parallel",),
            vmem_limit_bytes=_vmem_limit_bytes(workset)),
    )(x_bf16)


# ----------------------------------------------------------------------------
# Kernel 2: fused nearest-centre assignment + average merge for ALL scales
# (per batch b).  Centre ids of the three scales are concatenated along rows;
# seg_offsets/seg_sizes are static per-scale row segments.
# ----------------------------------------------------------------------------
def _assign_merge_kernel(idx_ref, x_ref, out_ref, *, seg_offsets, seg_sizes):
    xb = x_ref[0]                                          # (N, C) bf16
    idx_col = idx_ref[0]                                   # (M, 1) int32
    N, C = xb.shape
    M = out_ref.shape[1]

    sq_row = jnp.transpose(
        jnp.sum(jnp.square(xb.astype(jnp.float32)), axis=-1, keepdims=True))   # (1,N)

    iota_n = jax.lax.broadcasted_iota(jnp.int32, (M, N), 1)   # token id per column
    iota_m = jax.lax.broadcasted_iota(jnp.int32, (M, N), 0)   # cluster id per row
    is_sel = iota_n == idx_col                                 # sel[m,n] = (index_down[m]==n)

    # Centre rows via a one-hot MXU matmul (no dynamic gather); 0/1 values are
    # exact in bf16, so centres hold the exact bf16 token values in f32.
    sel = is_sel.astype(jnp.bfloat16)
    centers = jnp.dot(sel, xb, preferred_element_type=jnp.float32)             # (M,C)
    center_sq = jnp.sum(jnp.square(centers), axis=-1, keepdims=True)           # (M,1)
    cross = jax.lax.dot_general(centers.astype(jnp.bfloat16), xb,
                                (((1,), (1,)), ((), ())),
                                preferred_element_type=jnp.float32)            # (M,N)
    d2 = jnp.maximum(center_sq + sq_row - 2.0 * cross, 0.0)   # ordering-only distances

    # Packed (value | row) keys: one min over axis 0 per scale yields the
    # nearest centre AND its global row id; ties break on lowest row id,
    # matching torch.argmin (modulo the shared low-bit truncation).
    idx_bits = max(1, (M - 1).bit_length())
    low_mask = (1 << idx_bits) - 1
    hi_mask = jnp.int32(~low_mask)
    int_max = jnp.int32(2147483647)
    keys = jnp.bitwise_or(jnp.bitwise_and(pltpu.bitcast(d2, jnp.int32), hi_mask), iota_m)

    onehot_b = jnp.zeros((M, N), jnp.bool_)
    for off, size in zip(seg_offsets, seg_sizes):          # static per-scale segments
        in_seg = (iota_m >= off) & (iota_m < off + size)
        kmin = jnp.min(jnp.where(in_seg, keys, int_max), axis=0, keepdims=True)   # (1,N)
        assign = jnp.bitwise_and(kmin, jnp.int32(low_mask))                       # (1,N)
        # Each centre belongs to its own cluster (reference's explicit override).
        center_id = jnp.max(jnp.where(is_sel & in_seg, iota_m, -1), axis=0, keepdims=True)
        assign = jnp.where(center_id >= 0, center_id, assign)
        onehot_b = onehot_b | (iota_m == assign)           # segments disjoint -> stays 0/1

    # Average merge: cluster sums AND counts as MXU matmuls (token_weight is all
    # ones in PatchClusterBlock, so all_weight == count + 1e-6; every cluster is
    # non-empty thanks to the centre override above).
    onehot = onehot_b.astype(jnp.bfloat16)
    sums = jnp.dot(onehot, xb, preferred_element_type=jnp.float32)              # (M,C)
    counts = jnp.dot(onehot, jnp.ones((N, 1), jnp.bfloat16),
                     preferred_element_type=jnp.float32)                        # (M,1)
    out_ref[0] = (sums / (counts + 1e-6)).astype(out_ref.dtype)


def assign_merge_pallas(x_bf16, index_all, seg_offsets, seg_sizes, out_dtype):
    B, N, C = x_bf16.shape
    M = index_all.shape[1]
    idx3 = index_all.astype(jnp.int32).reshape(B, M, 1)
    workset = 32 * M * N + 12 * M * C + 8 * N * C
    return pl.pallas_call(
        partial(_assign_merge_kernel, seg_offsets=tuple(seg_offsets),
                seg_sizes=tuple(seg_sizes)),
        out_shape=jax.ShapeDtypeStruct((B, M, C), out_dtype),
        grid=(B,),
        in_specs=[
            pl.BlockSpec((1, M, 1), lambda b: (b, 0, 0)),
            pl.BlockSpec((1, N, C), lambda b: (b, 0, 0)),
        ],
        out_specs=pl.BlockSpec((1, M, C), lambda b: (b, 0, 0)),
        compiler_params=pltpu.CompilerParams(
            dimension_semantics=("parallel",),
            vmem_limit_bytes=_vmem_limit_bytes(workset)),
    )(idx3, x_bf16)


# ----------------------------------------------------------------------------
# PatchCluster forward (JAX glue around the two fused kernels)
# ----------------------------------------------------------------------------
def patch_cluster_forward(
    x,
    *,
    use_cluster=True,
    num_scale_reps=3,
    cluster_rate0=0.5,
    cluster_rate1=0.25,
    cluster_rate2=0.125,
):
    # TODO(synk): dvt_selected_tokens_path (numpy-file token pre-selection with a
    # stateful example counter) and the 'attention' ClusterMerger branch are not
    # translated; the config under test uses use_cluster=True + 'average'.
    if not use_cluster:
        return None, x
    if num_scale_reps == 0:
        return None, None

    B, N, C = x.shape
    rates = [cluster_rate0, cluster_rate1, cluster_rate2][:num_scale_reps]
    k_inits = [5, 3, 3]

    cluster_nums, ks = [], []
    for i, rate in enumerate(rates):
        cn = max(math.ceil(rate), 1) if rate > 1 else max(math.ceil(N * rate), 1)
        cluster_nums.append(cn)
        k_init = k_inits[i]
        ks.append(min(3, max(cn // 2, 1)) if k_init > cn else k_init)

    # One fused DPC-KNN kernel for all scales: gram/d2 computed once, the
    # running k-NN sum snapshotted at every distinct effective k.
    ks_distinct = tuple(sorted(set(ks)))
    x_bf16 = x.astype(jnp.bfloat16)            # halve HBM traffic into both kernels
    scores = dpc_scores_pallas(x_bf16, ks_distinct)        # (B, Kd, N) f32
    k_to_row = {kv: r for r, kv in enumerate(ks_distinct)}

    # Per-scale cluster centres: top-k clustering score (plain-JAX glue).
    index_lists = []
    for i in range(len(rates)):
        _, idx_down = jax.lax.top_k(scores[:, k_to_row[ks[i]], :], cluster_nums[i])
        index_lists.append(idx_down.astype(jnp.int32))
    index_all = jnp.concatenate(index_lists, axis=1)       # (B, M_total)

    seg_sizes = tuple(cluster_nums)
    seg_offsets = tuple(int(sum(cluster_nums[:i])) for i in range(len(cluster_nums)))

    # One fused assignment + average-merge kernel across all scales.
    merged = assign_merge_pallas(x_bf16, index_all, seg_offsets, seg_sizes, x.dtype)
    return index_all, merged


if __name__ == "__main__":
    key = jax.random.PRNGKey(0)
    B, N, C = 2, 128, 128      # small, lane-aligned demo shapes (last dims % 128 == 0)
    patch_features = jax.random.normal(key, (B, N, C), dtype=jnp.float32)

    cluster_center_indices, cluster_patch_features = patch_cluster_forward(
        patch_features,
        use_cluster=True,
        num_scale_reps=3,
        cluster_rate0=0.5,
        cluster_rate1=0.25,
        cluster_rate2=0.125,
    )
    jax.block_until_ready(cluster_center_indices)
    jax.block_until_ready(cluster_patch_features)

    expected_tokens = 64 + 32 + 16     # ceil(N * rate_i), concatenated along dim 1
    assert cluster_center_indices.shape == (B, expected_tokens)
    assert cluster_patch_features.shape == (B, expected_tokens, C)
    assert cluster_patch_features.dtype == patch_features.dtype
    assert bool(jnp.all((cluster_center_indices >= 0) & (cluster_center_indices < N)))
    assert bool(jnp.all(jnp.isfinite(cluster_patch_features)))
    print("KERNEL_OK")
</pallas_src>

<mosaic_0001>
module attributes {stable_mosaic.version = 11 : i64} {
  func.func @_dpc_score_kernel(%arg0: i32, %arg1: memref<1x128x128xbf16, #tpu.memory_space<vmem>>, %arg2: memref<1x2x128xf32, #tpu.memory_space<vmem>>) attributes {dimension_semantics = [#tpu.dimension_semantics<parallel>], iteration_bounds = array<i64: 2>, scalar_prefetch = 0 : i64, scratch_operands = 0 : i64, tpu.core_type = #tpu.core_type<tc>, window_params = [{transform_indices = @transform_0, window_bounds = array<i64: 1, 128, 128>}, {transform_indices = @transform_1, window_bounds = array<i64: 1, 2, 128>}]} {
    %c0 = arith.constant 0 : index
    %c0_0 = arith.constant 0 : index
    %c0_1 = arith.constant 0 : index
    %0 = vector.load %arg1[%c0, %c0_0, %c0_1] : memref<1x128x128xbf16, #tpu.memory_space<vmem>>, vector<1x128x128xbf16>
    %1 = vector.shape_cast %0 : vector<1x128x128xbf16> to vector<128x128xbf16>
    %2 = arith.extf %1 : vector<128x128xbf16> to vector<128x128xf32>
    %3 = arith.mulf %2, %2 : vector<128x128xf32>
    %cst = arith.constant dense<0.000000e+00> : vector<128xf32>
    %4 = vector.multi_reduction <add>, %3, %cst [1] : vector<128x128xf32> to vector<128xf32>
    %5 = vector.shape_cast %4 : vector<128xf32> to vector<128x1xf32>
    %cst_2 = arith.constant dense<0.000000e+00> : vector<128x128xf32>
    %6 = tpu.matmul %1, %1, %cst_2 {dimension_numbers = #tpu.dot_dimension_numbers<[1], [1], [0], [0], [0, 0, 1, 0], [], []>} : vector<128x128xbf16>, vector<128x128xbf16>, vector<128x128xf32> -> vector<128x128xf32>
    %7 = tpu.transpose %5, [1, 0] : vector<128x1xf32> -> vector<1x128xf32>
    %8 = vector.broadcast %5 : vector<128x1xf32> to vector<128x128xf32>
    %9 = vector.broadcast %7 : vector<1x128xf32> to vector<128x128xf32>
    %10 = arith.addf %8, %9 : vector<128x128xf32>
    %cst_3 = arith.constant 2.000000e+00 : f32
    %11 = vector.broadcast %cst_3 : f32 to vector<128x128xf32>
    %12 = arith.mulf %11, %6 : vector<128x128xf32>
    %13 = arith.subf %10, %12 : vector<128x128xf32>
    %cst_4 = arith.constant 0.000000e+00 : f32
    %14 = vector.broadcast %cst_4 : f32 to vector<128x128xf32>
    %15 = arith.maximumf %13, %14 : vector<128x128xf32>
    %16 = tpu.iota {dimensions = array<i32: 1>} : vector<128x128xi32>
    %17 = tpu.bitcast %15 : vector<128x128xf32> -> vector<128x128xi32>
    %c-128_i32 = arith.constant -128 : i32
    %18 = vector.broadcast %c-128_i32 : i32 to vector<128x128xi32>
    %19 = arith.andi %17, %18 : vector<128x128xi32>
    %20 = arith.ori %19, %16 : vector<128x128xi32>
    %21 = vector.shape_cast %15 : vector<128x128xf32> to vector<1x128x128xf32>
    %cst_5 = arith.constant dense<0xFF800000> : vector<1xf32>
    %22 = vector.multi_reduction <maximumf>, %21, %cst_5 [1, 2] : vector<1x128x128xf32> to vector<1xf32>
    %23 = vector.shape_cast %22 : vector<1xf32> to vector<1x1x1xf32>
    %24 = vector.extract %23[0, 0, 0] : f32 from vector<1x1x1xf32>
    %cst_6 = arith.constant 0.000000e+00 : f32
    %25 = vector.broadcast %cst_6 : f32 to vector<128x1xf32>
    %cst_7 = arith.constant dense<2147483647> : vector<128xi32>
    %26 = vector.multi_reduction <minsi>, %20, %cst_7 [1] : vector<128x128xi32> to vector<128xi32>
    %27 = vector.shape_cast %26 : vector<128xi32> to vector<128x1xi32>
    %c-128_i32_8 = arith.constant -128 : i32
    %28 = vector.broadcast %c-128_i32_8 : i32 to vector<128x1xi32>
    %29 = arith.andi %27, %28 : vector<128x1xi32>
    %30 = tpu.bitcast %29 : vector<128x1xi32> -> vector<128x1xf32>
    %31 = arith.addf %25, %30 : vector<128x1xf32>
    %32 = vector.broadcast %27 : vector<128x1xi32> to vector<128x128xi32>
    %33 = arith.cmpi eq, %20, %32 : vector<128x128xi32>
    %c2147483647_i32 = arith.constant 2147483647 : i32
    %34 = vector.broadcast %c2147483647_i32 : i32 to vector<128x128xi32>
    %35 = arith.select %33, %34, %20 : vector<128x128xi1>, vector<128x128xi32>
    %cst_9 = arith.constant dense<2147483647> : vector<128xi32>
    %36 = vector.multi_reduction <minsi>, %35, %cst_9 [1] : vector<128x128xi32> to vector<128xi32>
    %37 = vector.shape_cast %36 : vector<128xi32> to vector<128x1xi32>
    %c-128_i32_10 = arith.constant -128 : i32
    %38 = vector.broadcast %c-128_i32_10 : i32 to vector<128x1xi32>
    %39 = arith.andi %37, %38 : vector<128x1xi32>
    %40 = tpu.bitcast %39 : vector<128x1xi32> -> vector<128x1xf32>
    %41 = arith.addf %31, %40 : vector<128x1xf32>
    %42 = vector.broadcast %37 : vector<128x1xi32> to vector<128x128xi32>
    %43 = arith.cmpi eq, %35, %42 : vector<128x128xi32>
    %c2147483647_i32_11 = arith.constant 2147483647 : i32
    %44 = vector.broadcast %c2147483647_i32_11 : i32 to vector<128x128xi32>
    %45 = arith.select %43, %44, %35 : vector<128x128xi1>, vector<128x128xi32>
    %cst_12 = arith.constant dense<2147483647> : vector<128xi32>
    %46 = vector.multi_reduction <minsi>, %45, %cst_12 [1] : vector<128x128xi32> to vector<128xi32>
    %47 = vector.shape_cast %46 : vector<128xi32> to vector<128x1xi32>
    %c-128_i32_13 = arith.constant -128 : i32
    %48 = vector.broadcast %c-128_i32_13 : i32 to vector<128x1xi32>
    %49 = arith.andi %47, %48 : vector<128x1xi32>
    %50 = tpu.bitcast %49 : vector<128x1xi32> -> vector<128x1xf32>
    %51 = arith.addf %41, %50 : vector<128x1xf32>
    %52 = vector.broadcast %47 : vector<128x1xi32> to vector<128x128xi32>
    %53 = arith.cmpi eq, %45, %52 : vector<128x128xi32>
    %c2147483647_i32_14 = arith.constant 2147483647 : i32
    %54 = vector.broadcast %c2147483647_i32_14 : i32 to vector<128x128xi32>
    %55 = arith.select %53, %54, %45 : vector<128x128xi1>, vector<128x128xi32>
    %cst_15 = arith.constant 0.000000e+00 : f32
    %56 = vector.broadcast %cst_15 : f32 to vector<128x1xf32>
    %57 = arith.subf %56, %51 : vector<128x1xf32>
    %cst_16 = arith.constant 3.840000e+02 : f32
    %58 = vector.broadcast %cst_16 : f32 to vector<128x1xf32>
    %59 = arith.divf %57, %58 : vector<128x1xf32>
    %60 = math.exp %59 : vector<128x1xf32>
    %61 = tpu.transpose %60, [1, 0] : vector<128x1xf32> -> vector<1x128xf32>
    %62 = vector.broadcast %61 : vector<1x128xf32> to vector<128x128xf32>
    %63 = vector.broadcast %60 : vector<128x1xf32> to vector<128x128xf32>
    %64 = arith.cmpf ogt, %62, %63 : vector<128x128xf32>
    %65 = vector.broadcast %24 : f32 to vector<128x128xf32>
    %66 = arith.select %64, %15, %65 : vector<128x128xi1>, vector<128x128xf32>
    %cst_17 = arith.constant dense<0x7F800000> : vector<128xf32>
    %67 = vector.multi_reduction <minimumf>, %66, %cst_17 [1] : vector<128x128xf32> to vector<128xf32>
    %68 = vector.shape_cast %67 : vector<128xf32> to vector<128x1xf32>
    %69 = math.sqrt %68 : vector<128x1xf32>
    %cst_18 = arith.constant 0.0883883461 : f32
    %70 = vector.broadcast %cst_18 : f32 to vector<128x1xf32>
    %71 = arith.mulf %69, %70 : vector<128x1xf32>
    %72 = arith.mulf %71, %60 : vector<128x1xf32>
    %73 = tpu.transpose %72, [1, 0] : vector<128x1xf32> -> vector<1x128xf32>
    %cst_19 = arith.constant dense<2147483647> : vector<128xi32>
    %74 = vector.multi_reduction <minsi>, %55, %cst_19 [1] : vector<128x128xi32> to vector<128xi32>
    %75 = vector.shape_cast %74 : vector<128xi32> to vector<128x1xi32>
    %c-128_i32_20 = arith.constant -128 : i32
    %76 = vector.broadcast %c-128_i32_20 : i32 to vector<128x1xi32>
    %77 = arith.andi %75, %76 : vector<128x1xi32>
    %78 = tpu.bitcast %77 : vector<128x1xi32> -> vector<128x1xf32>
    %79 = arith.addf %51, %78 : vector<128x1xf32>
    %80 = vector.broadcast %75 : vector<128x1xi32> to vector<128x128xi32>
    %81 = arith.cmpi eq, %55, %80 : vector<128x128xi32>
    %c2147483647_i32_21 = arith.constant 2147483647 : i32
    %82 = vector.broadcast %c2147483647_i32_21 : i32 to vector<128x128xi32>
    %83 = arith.select %81, %82, %55 : vector<128x128xi1>, vector<128x128xi32>
    %cst_22 = arith.constant dense<2147483647> : vector<128xi32>
    %84 = vector.multi_reduction <minsi>, %83, %cst_22 [1] : vector<128x128xi32> to vector<128xi32>
    %85 = vector.shape_cast %84 : vector<128xi32> to vector<128x1xi32>
    %c-128_i32_23 = arith.constant -128 : i32
    %86 = vector.broadcast %c-128_i32_23 : i32 to vector<128x1xi32>
    %87 = arith.andi %85, %86 : vector<128x1xi32>
    %88 = tpu.bitcast %87 : vector<128x1xi32> -> vector<128x1xf32>
    %89 = arith.addf %79, %88 : vector<128x1xf32>
    %cst_24 = arith.constant 0.000000e+00 : f32
    %90 = vector.broadcast %cst_24 : f32 to vector<128x1xf32>
    %91 = arith.subf %90, %89 : vector<128x1xf32>
    %cst_25 = arith.constant 6.400000e+02 : f32
    %92 = vector.broadcast %cst_25 : f32 to vector<128x1xf32>
    %93 = arith.divf %91, %92 : vector<128x1xf32>
    %94 = math.exp %93 : vector<128x1xf32>
    %95 = tpu.transpose %94, [1, 0] : vector<128x1xf32> -> vector<1x128xf32>
    %96 = vector.broadcast %95 : vector<1x128xf32> to vector<128x128xf32>
    %97 = vector.broadcast %94 : vector<128x1xf32> to vector<128x128xf32>
    %98 = arith.cmpf ogt, %96, %97 : vector<128x128xf32>
    %99 = vector.broadcast %24 : f32 to vector<128x128xf32>
    %100 = arith.select %98, %15, %99 : vector<128x128xi1>, vector<128x128xf32>
    %cst_26 = arith.constant dense<0x7F800000> : vector<128xf32>
    %101 = vector.multi_reduction <minimumf>, %100, %cst_26 [1] : vector<128x128xf32> to vector<128xf32>
    %102 = vector.shape_cast %101 : vector<128xf32> to vector<128x1xf32>
    %103 = math.sqrt %102 : vector<128x1xf32>
    %cst_27 = arith.constant 0.0883883461 : f32
    %104 = vector.broadcast %cst_27 : f32 to vector<128x1xf32>
    %105 = arith.mulf %103, %104 : vector<128x1xf32>
    %106 = arith.mulf %105, %94 : vector<128x1xf32>
    %107 = tpu.transpose %106, [1, 0] : vector<128x1xf32> -> vector<1x128xf32>
    %108 = tpu.concatenate %73, %107 in 0 : vector<1x128xf32>, vector<1x128xf32> -> vector<2x128xf32>
    %c0_28 = arith.constant 0 : index
    %c0_29 = arith.constant 0 : index
    %c0_30 = arith.constant 0 : index
    %109 = vector.load %arg2[%c0_28, %c0_29, %c0_30] : memref<1x2x128xf32, #tpu.memory_space<vmem>>, vector<1x2x128xf32>
    %110 = vector.shape_cast %109 : vector<1x2x128xf32> to vector<2x128xf32>
    %111 = vector.shape_cast %108 : vector<2x128xf32> to vector<1x2x128xf32>
    tpu.vector_store %arg2[%c0_28, %c0_29, %c0_30], %111 {strides = array<i32>} : memref<1x2x128xf32, #tpu.memory_space<vmem>>, vector<1x2x128xf32>,
    return
  }
  func.func @transform_0(%arg0: i32) -> (i32, i32, i32) {
    %c0_i32 = arith.constant 0 : i32
    %c0_i32_0 = arith.constant 0 : i32
    %c0_i32_1 = arith.constant 0 : i32
    return %arg0, %c0_i32, %c0_i32_0 : i32, i32, i32
  }
  func.func @transform_1(%arg0: i32) -> (i32, i32, i32) {
    %c0_i32 = arith.constant 0 : i32
    %c0_i32_0 = arith.constant 0 : i32
    %c0_i32_1 = arith.constant 0 : i32
    return %arg0, %c0_i32, %c0_i32_0 : i32, i32, i32
  }
}

</mosaic_0001>

<llo_original>
// kernel: tpu_custom_call.1
$region0: #{tpu_custom_call.1}
  #allocation0 [shape = 'u32[]', space=smem, size = 0x4, offset = 0x4, fixed_abs, tag = 'smem constant byte address 0x4 - core index']
  #allocation1 [shape = 'u32[144,128]{1,0:T(1,128)}', space=vmem, size = 0x12000, scoped, tag = 'internal scratch']
  %s0 = inlined_call_operand.hbm [shape: bf16[2,128,128], index: 0, kind: input, shape index: {}]
  %s1 = inlined_call_operand.hbm [shape: f32[2,2,128], index: 1, kind: output, shape index: {}]
  %s2 = sld [smem:[#allocation0]]
  $region41: #{tpu_custom_call.1} parent=0
    _
  %s4 = ssub.s32 1, %s2
  %s5 = scalar_select 0, %s4, %s2
  $region1: #{tpu_custom_call.1} parent=0
    #allocation2 [shape = 'u8[65536]{0}', space=vmem, size = 0x10000, scoped, tag = 'input window, operand 0']
    #allocation3 [shape = 's32[2]{0}', space=sflag, size = 0x8, scoped, tag = 'scoped memory for tpu_custom_call.1']
    #allocation4 [shape = 's32[2]{0}', space=sflag, size = 0x8, scoped, tag = 'scoped memory for tpu_custom_call.1']
    #allocation5 [shape = 'u8[2048]{0}', space=vmem, size = 0x800, scoped, tag = 'output window, operand 0']
    %6 = vsyncpa [#allocation3], 0
    %s7 = scalar_lea.sflag [#allocation3], 1
    %8 = vsyncpa %s7, 0
    %9 = vsyncpa [#allocation4], 0
    %s10 = scalar_lea.sflag [#allocation4], 1
    %11 = vsyncpa %s10, 0
    loop: start=0, step=1, limit=4
    $region2: #{tpu_custom_call.1} parent=1 // loop_pre_header
      _
    $region3: #{tpu_custom_call.1} parent=1 // loop_header
      %s13 = sphi 0, %s17
      %p14 = scmp.ge.s32.totalorder %s13, 4
      %s23 = sphi 0, %s25
      %s26 = sphi 0, %s23
      %s27 = sphi 0, %s26
      %s43 = sphi 0, %s27
      %s49 = sphi 0, %s51
      %s52 = sphi 0, %s49
      %s53 = sphi 0, %s52
      %s69 = sphi 0, %s53
    $region4: #{tpu_custom_call.1} parent=1 // loop_header_branch
      %16 = sbr.rel (%p14) target = $region8
    $region5: #{tpu_custom_call.1} parent=1 // loop_body
      %s18 = ssub.s32 %s13, 1
      %s19 = ssub.s32 %s13, 2
      %s20 = sadd.s32 %s13, 1
      %s21 = ssub.s32 %s13, %s20
      %p22 = scmp.eq.s32.totalorder %s21, 0
      %s24 = sadd.s32 %s23, 1
      %s25 = scalar_select %p22, %s23, %s24
      %p28 = pneg %p22
      %p29 = scmp.eq.s32.totalorder %s13, 1
      %p30 = por %p28, %p29
      %p31 = scmp.ne.s32.totalorder %s23, %s26
      %p32 = scmp.eq.s32.totalorder %s13, 0
      %p33 = por %p31, %p32
      %p34 = scmp.ne.s32.totalorder %s23, %s26
      %p35 = scmp.eq.s32.totalorder %s18, 1
      %p36 = por %p34, %p35
      %p37 = scmp.ne.s32.totalorder %s26, %s27
      %p38 = scmp.eq.s32.totalorder %s18, 0
      %p39 = por %p37, %p38
      %p40 = scmp.ne.s32.totalorder %s26, %s27
      %p41 = scmp.eq.s32.totalorder %s19, 1
      %p42 = por %p40, %p41
      %p44 = scmp.ne.s32.totalorder %s27, %s43
      %p45 = scmp.eq.s32.totalorder %s19, 0
      %p46 = por %p44, %p45
      %s47 = ssub.s32 %s13, %s20
      %p48 = scmp.eq.s32.totalorder %s47, 0
      %s50 = sadd.s32 %s49, 1
      %s51 = scalar_select %p48, %s49, %s50
      %p54 = pneg %p48
      %p55 = scmp.eq.s32.totalorder %s13, 1
      %p56 = por %p54, %p55
      %p57 = scmp.ne.s32.totalorder %s49, %s52
      %p58 = scmp.eq.s32.totalorder %s13, 0
      %p59 = por %p57, %p58
      %p60 = scmp.ne.s32.totalorder %s49, %s52
      %p61 = scmp.eq.s32.totalorder %s18, 1
      %p62 = por %p60, %p61
      %p63 = scmp.ne.s32.totalorder %s52, %s53
      %p64 = scmp.eq.s32.totalorder %s18, 0
      %p65 = por %p63, %p64
      %p66 = scmp.ne.s32.totalorder %s52, %s53
      %p67 = scmp.eq.s32.totalorder %s19, 1
      %p68 = por %p66, %p67
      %p70 = scmp.ne.s32.totalorder %s53, %s69
      %p71 = scmp.eq.s32.totalorder %s19, 0
      %p72 = por %p70, %p71
      %p73 = scmp.le.s32.totalorder 1, %s13
      %p74 = scmp.lt.s32.totalorder %s13, 3
      %p75 = pnand %p73, %p74
      %p76 = pneg %p75
      // Predicated region
      $region9: #{tpu_custom_call.1} parent=5 // pred_check
        _
      $region10: #{tpu_custom_call.1} parent=5 // pred_check_branch
        %78 = sbr.rel (%p75) target = $region12
      $region11: #{tpu_custom_call.1} parent=5 // pred_region
        %s79 = ssub.s32 %s13, 1
      $region12: #{tpu_custom_call.1} parent=5 // pred_fallthru
        _
      %p80 = scmp.lt.s32.totalorder %s13, 2
      // Predicated region
      $region13: #{tpu_custom_call.1} parent=5 // pred_check
        %p81 = pneg %p80
      $region14: #{tpu_custom_call.1} parent=5 // pred_check_branch
        %83 = sbr.rel (%p81) target = $region16
      $region15: #{tpu_custom_call.1} parent=5 // pred_region
        // Predicated region
        $region17: #{tpu_custom_call.1} parent=15 // pred_check
          %p84 = pneg %p33
        $region18: #{tpu_custom_call.1} parent=15 // pred_check_branch
          %86 = sbr.rel (%p84) target = $region20
        $region19: #{tpu_custom_call.1} parent=15 // pred_region
          %s87 = sand.u32 %s23, 1
          %s88 = scalar_lea.sflag [#allocation3], %s87
          %s89 = sand.u32 %s23, 1
          %s90 = smul.addr %s89, 64
          %s91 = scalar_lea.vmem [#allocation2], %s90
          %s93 = ssub.s32 1024, 1024
          %94 = vsyncadd %s88, %s93
          %s95 = smul.addr %s13, 16
          %s96 = smul.addr %s95, 64
          %s97 = scalar_lea.hbm %s0, %s96
          %s98 = sshll.u32 %s91, 4
          %s99 = int_to_ptr.vmem [resolvable:$true] %s98
          %104 = dma.hbm_to_vmem [thread:$0]  %s97, 1024, %s99, %s88, 64, 64, 4
        $region20: #{tpu_custom_call.1} parent=15 // pred_fallthru
          _
      $region16: #{tpu_custom_call.1} parent=5 // pred_fallthru
        _
      %p105 = scmp.le.s32.totalorder 1, %s13
      %p106 = scmp.lt.s32.totalorder %s13, 3
      %p107 = pnand %p105, %p106
      %p108 = pneg %p107
      // Predicated region
      $region21: #{tpu_custom_call.1} parent=5 // pred_check
        _
      $region22: #{tpu_custom_call.1} parent=5 // pred_check_branch
        %110 = sbr.rel (%p107) target = $region24
      $region23: #{tpu_custom_call.1} parent=5 // pred_region
        %s111 = ssub.s32 %s13, 1
        %s112 = sand.u32 %s26, 1
        %s113 = scalar_lea.sflag [#allocation3], %s112
        %s114 = sand.u32 %s26, 1
        %s115 = smul.addr %s114, 64
        %s116 = scalar_lea.vmem [#allocation2], %s115
        // Predicated region
        $region25: #{tpu_custom_call.1} parent=23 // pred_check
          %p117 = pneg %p39
        $region26: #{tpu_custom_call.1} parent=23 // pred_check_branch
          %119 = sbr.rel (%p117) target = $region28
        $region27: #{tpu_custom_call.1} parent=23 // pred_region
          %120 = dma.done %s113, 1024
        $region28: #{tpu_custom_call.1} parent=23 // pred_fallthru
          _
        %s121 = sand.u32 %s26, 1
        %s122 = scalar_lea.sflag [#allocation3], %s121
        %s123 = sand.u32 %s26, 1
        %s124 = smul.addr %s123, 64
        %s125 = scalar_lea.vmem [#allocation2], %s124
        %p126 = pneg %p39
        %p127 = pneg %p36
        %p128 = pneg %p65
        %p129 = pneg %p62
        %s130 = sand.u32 %s52, 1
        %s131 = scalar_lea.sflag [#allocation4], %s130
        %s132 = sand.u32 %s52, 1
        %s133 = smul.addr %s132, 2
        %s134 = scalar_lea.vmem [#allocation5], %s133
        %v136 = vld [vmem:[%s116] sm:$0xf]
        %v137 = vld [vmem:[%s116 + $0x4] sm:$0xf]
        %v138 = vld [vmem:[%s116 + $0x8] sm:$0xf]
        %v139 = vld [vmem:[%s116 + $0xc] sm:$0xf]
        %v140 = vld [vmem:[%s116 + $0x10] sm:$0xf]
        %v141 = vld [vmem:[%s116 + $0x14] sm:$0xf]
        %v142 = vld [vmem:[%s116 + $0x18] sm:$0xf]
        %v143 = vld [vmem:[%s116 + $0x1c] sm:$0xf]
        %v144 = vld [vmem:[%s116 + $0x20] sm:$0xf]
        %v145 = vld [vmem:[%s116 + $0x24] sm:$0xf]
        %v146 = vld [vmem:[%s116 + $0x28] sm:$0xf]
        %v147 = vld [vmem:[%s116 + $0x2c] sm:$0xf]
        %v148 = vld [vmem:[%s116 + $0x30] sm:$0xf]
        %v149 = vld [vmem:[%s116 + $0x34] sm:$0xf]
        %v150 = vld [vmem:[%s116 + $0x38] sm:$0xf]
        %v151 = vld [vmem:[%s116 + $0x3c] sm:$0xf]
        %v152 = vunpack.c.l.bf16 %v136
        %v153 = vunpack.c.l.bf16 %v137
        %v154 = vunpack.c.l.bf16 %v138
        %v155 = vunpack.c.l.bf16 %v139
        %v156 = vunpack.c.l.bf16 %v140
        %v157 = vunpack.c.l.bf16 %v141
        %v158 = vunpack.c.l.bf16 %v142
        %v159 = vunpack.c.l.bf16 %v143
        %v160 = vunpack.c.l.bf16 %v144
        %v161 = vunpack.c.l.bf16 %v145
        %v162 = vunpack.c.l.bf16 %v146
        %v163 = vunpack.c.l.bf16 %v147
        %v164 = vunpack.c.l.bf16 %v148
        %v165 = vunpack.c.l.bf16 %v149
        %v166 = vunpack.c.l.bf16 %v150
        %v167 = vunpack.c.l.bf16 %v151
        %v168 = vmul.f32 %v152, %v152
        %v169 = vmul.f32 %v153, %v153
        %v170 = vmul.f32 %v154, %v154
        %v171 = vmul.f32 %v155, %v155
        %v172 = vmul.f32 %v156, %v156
        %v173 = vmul.f32 %v157, %v157
        %v174 = vmul.f32 %v158, %v158
        %v175 = vmul.f32 %v159, %v159
        %v176 = vmul.f32 %v160, %v160
        %v177 = vmul.f32 %v161, %v161
        %v178 = vmul.f32 %v162, %v162
        %v179 = vmul.f32 %v163, %v163
        %v180 = vmul.f32 %v164, %v164
        %v181 = vmul.f32 %v165, %v165
        %v182 = vmul.f32 %v166, %v166
        %v183 = vmul.f32 %v167, %v167
        %184 = vadd.xlane.f32.xlu0 %v168
        %v185 = vpop.xlane.xlu0 %184
        %186 = vadd.xlane.f32.xlu0 %v169
        %v187 = vpop.xlane.xlu0 %186
        %188 = vadd.xlane.f32.xlu0 %v170
        %v189 = vpop.xlane.xlu0 %188
        %190 = vadd.xlane.f32.xlu0 %v171
        %v191 = vpop.xlane.xlu0 %190
        %192 = vadd.xlane.f32.xlu0 %v172
        %v193 = vpop.xlane.xlu0 %192
        %194 = vadd.xlane.f32.xlu0 %v173
        %v195 = vpop.xlane.xlu0 %194
        %196 = vadd.xlane.f32.xlu0 %v174
        %v197 = vpop.xlane.xlu0 %196
        %198 = vadd.xlane.f32.xlu0 %v175
        %v199 = vpop.xlane.xlu0 %198
        %200 = vadd.xlane.f32.xlu0 %v176
        %v201 = vpop.xlane.xlu0 %200
        %202 = vadd.xlane.f32.xlu0 %v177
        %v203 = vpop.xlane.xlu0 %202
        %204 = vadd.xlane.f32.xlu0 %v178
        %v205 = vpop.xlane.xlu0 %204
        %206 = vadd.xlane.f32.xlu0 %v179
        %v207 = vpop.xlane.xlu0 %206
        %208 = vadd.xlane.f32.xlu0 %v180
        %v209 = vpop.xlane.xlu0 %208
        %210 = vadd.xlane.f32.xlu0 %v181
        %v211 = vpop.xlane.xlu0 %210
        %212 = vadd.xlane.f32.xlu0 %v182
        %v213 = vpop.xlane.xlu0 %212
        %214 = vadd.xlane.f32.xlu0 %v183
        %v215 = vpop.xlane.xlu0 %214
        %v232 = vunpack.c.l.b16 %v136
        %v233 = vunpack.c.l.b16 %v137
        %v234 = vunpack.c.l.b16 %v138
        %v235 = vunpack.c.l.b16 %v139
        %v236 = vunpack.c.l.b16 %v140
        %v237 = vunpack.c.l.b16 %v141
        %v238 = vunpack.c.l.b16 %v142
        %v239 = vunpack.c.l.b16 %v143
        %v240 = vunpack.c.l.b16 %v144
        %v241 = vunpack.c.l.b16 %v145
        %v242 = vunpack.c.l.b16 %v146
        %v243 = vunpack.c.l.b16 %v147
        %v244 = vunpack.c.l.b16 %v148
        %v245 = vunpack.c.l.b16 %v149
        %v246 = vunpack.c.l.b16 %v150
        %v247 = vunpack.c.l.b16 %v151
        %v248 = vpack.c.b16 %v233, %v232
        %v249 = vpack.c.b16 %v235, %v234
        %v250 = vpack.c.b16 %v237, %v236
        %v251 = vpack.c.b16 %v239, %v238
        %v252 = vpack.c.b16 %v241, %v240
        %v253 = vpack.c.b16 %v243, %v242
        %v254 = vpack.c.b16 %v245, %v244
        %v255 = vpack.c.b16 %v247, %v246
        %264 = vmatprep.subr.bf16.mxu0 0
        %265 = vmatpush1.bf16.xpose.msra.mxu0 %v248
        %266 = vmatprep.subr.bf16.mxu0 0
        %267 = vmatpush1.bf16.xpose.msra.mxu0 %v249
        %268 = vmatprep.subr.bf16.mxu0 0
        %269 = vmatpush1.bf16.xpose.msra.mxu0 %v250
        %270 = vmatprep.subr.bf16.mxu0 0
        %271 = vmatpush1.bf16.xpose.msra.mxu0 %v251
        %272 = vmatprep.subr.bf16.mxu0 0
        %273 = vmatpush1.bf16.xpose.msra.mxu0 %v252
        %274 = vmatprep.subr.bf16.mxu0 0
        %275 = vmatpush1.bf16.xpose.msra.mxu0 %v253
        %276 = vmatprep.subr.bf16.mxu0 0
        %277 = vmatpush1.bf16.xpose.msra.mxu0 %v254
        %278 = vmatprep.subr.bf16.mxu0 0
        %279 = vmatpush1.bf16.xpose.msra.mxu0 %v255
        %280 = vmatprep.subr.bf16.mxu0 0
        %281 = vmatpush1.bf16.xpose.msra.mxu0 0
        %282 = vmatprep.subr.bf16.mxu0 0
        %283 = vmatpush1.bf16.xpose.msra.mxu0 0
        %284 = vmatprep.subr.bf16.mxu0 0
        %285 = vmatpush1.bf16.xpose.msra.mxu0 0
        %286 = vmatprep.subr.bf16.mxu0 0
        %287 = vmatpush1.bf16.xpose.msra.mxu0 0
        %288 = vmatprep.subr.bf16.mxu0 0
        %289 = vmatpush1.bf16.xpose.msra.mxu0 0
        %290 = vmatprep.subr.bf16.mxu0 0
        %291 = vmatpush1.bf16.xpose.msra.mxu0 0
        %292 = vmatprep.subr.bf16.mxu0 0
        %293 = vmatpush1.bf16.xpose.msra.mxu0 0
        %294 = vmatprep.subr.bf16.mxu0 0
        %295 = vmatpush1.bf16.xpose.msra.mxu0 0
        %296 = vmatprep.mubr.bf16.mxu0 0
        %297 = vmatmul.mubr.bf16.gmra.mrb[0].mxu0 %v248
        %v298 = vpop.f32.mrb[0].mxu0
        %v299 = vadd.f32 0.0, %v298
        %v300 = vpop.f32.mrb[0].mxu0
        %v301 = vpop.f32.mrb[0].mxu0
        %v302 = vadd.f32 0.0, %v301
        %v303 = vpop.f32.mrb[0].mxu0
        %304 = vmatprep.mubr.bf16.mxu0 0
        %305 = vmatmul.mubr.bf16.gmra.mrb[0].mxu0 %v249
        %v306 = vpop.f32.mrb[0].mxu0
        %v307 = vadd.f32 0.0, %v306
        %v308 = vpop.f32.mrb[0].mxu0
        %v309 = vpop.f32.mrb[0].mxu0
        %v310 = vadd.f32 0.0, %v309
        %v311 = vpop.f32.mrb[0].mxu0
        %312 = vmatprep.mubr.bf16.mxu0 0
        %313 = vmatmul.mubr.bf16.gmra.mrb[0].mxu0 %v250
        %v314 = vpop.f32.mrb[0].mxu0
        %v315 = vadd.f32 0.0, %v314
        %v316 = vpop.f32.mrb[0].mxu0
        %v317 = vpop.f32.mrb[0].mxu0
        %v318 = vadd.f32 0.0, %v317
        %v319 = vpop.f32.mrb[0].mxu0
        %320 = vmatprep.mubr.bf16.mxu0 0
        %321 = vmatmul.mubr.bf16.gmra.mrb[0].mxu0 %v251
        %v322 = vpop.f32.mrb[0].mxu0
        %v323 = vadd.f32 0.0, %v322
        %v324 = vpop.f32.mrb[0].mxu0
        %v325 = vpop.f32.mrb[0].mxu0
        %v326 = vadd.f32 0.0, %v325
        %v327 = vpop.f32.mrb[0].mxu0
        %328 = vmatprep.mubr.bf16.mxu0 0
        %329 = vmatmul.mubr.bf16.gmra.mrb[0].mxu0 %v252
        %v330 = vpop.f32.mrb[0].mxu0
        %v331 = vadd.f32 0.0, %v330
        %v332 = vpop.f32.mrb[0].mxu0
        %v333 = vpop.f32.mrb[0].mxu0
        %v334 = vadd.f32 0.0, %v333
        %v335 = vpop.f32.mrb[0].mxu0
        %336 = vmatprep.mubr.bf16.mxu0 0
        %337 = vmatmul.mubr.bf16.gmra.mrb[0].mxu0 %v253
        %v338 = vpop.f32.mrb[0].mxu0
        %v339 = vadd.f32 0.0, %v338
        %v340 = vpop.f32.mrb[0].mxu0
        %v341 = vpop.f32.mrb[0].mxu0
        %v342 = vadd.f32 0.0, %v341
        %v343 = vpop.f32.mrb[0].mxu0
        %344 = vmatprep.mubr.bf16.mxu0 0
        %345 = vmatmul.mubr.bf16.gmra.mrb[0].mxu0 %v254
        %v346 = vpop.f32.mrb[0].mxu0
        %v347 = vadd.f32 0.0, %v346
        %v348 = vpop.f32.mrb[0].mxu0
        %v349 = vpop.f32.mrb[0].mxu0
        %v350 = vadd.f32 0.0, %v349
        %v351 = vpop.f32.mrb[0].mxu0
        %352 = vmatprep.mubr.bf16.mxu0 0
        %353 = vmatmul.mubr.bf16.gmra.mrb[0].mxu0 %v255
        %v354 = vpop.f32.mrb[0].mxu0
        %v355 = vadd.f32 0.0, %v354
        %v356 = vpop.f32.mrb[0].mxu0
        %v357 = vpop.f32.mrb[0].mxu0
        %v358 = vadd.f32 0.0, %v357
        %v359 = vpop.f32.mrb[0].mxu0
        %360 = vdwg.mxu0
        %361 = vxpose.xlu0.b32.start [1/16] %v185, 128
        %362 = vxpose.xlu0.b32.cont [2/16] %v187, 128
        %363 = vxpose.xlu0.b32.cont [3/16] %v189, 128
        %364 = vxpose.xlu0.b32.cont [4/16] %v191, 128
        %365 = vxpose.xlu0.b32.cont [5/16] %v193, 128
        %366 = vxpose.xlu0.b32.cont [6/16] %v195, 128
        %367 = vxpose.xlu0.b32.cont [7/16] %v197, 128
        %368 = vxpose.xlu0.b32.cont [8/16] %v199, 128
        %369 = vxpose.xlu0.b32.cont [9/16] %v201, 128
        %370 = vxpose.xlu0.b32.cont [10/16] %v203, 128
        %371 = vxpose.xlu0.b32.cont [11/16] %v205, 128
        %372 = vxpose.xlu0.b32.cont [12/16] %v207, 128
        %373 = vxpose.xlu0.b32.cont [13/16] %v209, 128
        %374 = vxpose.xlu0.b32.cont [14/16] %v211, 128
        %375 = vxpose.xlu0.b32.cont [15/16] %v213, 128
        %376 = vxpose.xlu0.b32.end [16/16] %v215, 128
        %v377 = vpop.trf.xlu0
        %v378 = vpop.trf.xlu0
        %v379 = vpop.trf.xlu0
        %v380 = vpop.trf.xlu0
        %v381 = vpop.trf.xlu0
        %v382 = vpop.trf.xlu0
        %v383 = vpop.trf.xlu0
        %v384 = vpop.trf.xlu0
        %v385 = vpop.trf.xlu0
        %v386 = vpop.trf.xlu0
        %v387 = vpop.trf.xlu0
        %v388 = vpop.trf.xlu0
        %v389 = vpop.trf.xlu0
        %v390 = vpop.trf.xlu0
        %v391 = vpop.trf.xlu0
        %v392 = vpop.trf.xlu0
        %v393 = vlaneseq
        %v394 = vshrl.u32 %v393, 7
        %v395 = vsub.s32 0, %v394
        %v396 = vrot.slane %v377, %v395
        %v397 = vadd.f32 %v185, %v396
        %v398 = vadd.f32 %v187, %v396
        %v399 = vadd.f32 %v189, %v396
        %v400 = vadd.f32 %v191, %v396
        %v401 = vadd.f32 %v193, %v396
        %v402 = vadd.f32 %v195, %v396
        %v403 = vadd.f32 %v197, %v396
        %v404 = vadd.f32 %v199, %v396
        %v405 = vadd.f32 %v201, %v396
        %v406 = vadd.f32 %v203, %v396
        %v407 = vadd.f32 %v205, %v396
        %v408 = vadd.f32 %v207, %v396
        %v409 = vadd.f32 %v209, %v396
        %v410 = vadd.f32 %v211, %v396
        %v411 = vadd.f32 %v213, %v396
        %v412 = vadd.f32 %v215, %v396
        %v413 = vmul.f32 %v299, 2.0
        %v414 = vmul.f32 %v302, 2.0
        %v415 = vmul.f32 %v307, 2.0
        %v416 = vmul.f32 %v310, 2.0
        %v417 = vmul.f32 %v315, 2.0
        %v418 = vmul.f32 %v318, 2.0
        %v419 = vmul.f32 %v323, 2.0
        %v420 = vmul.f32 %v326, 2.0
        %v421 = vmul.f32 %v331, 2.0
        %v422 = vmul.f32 %v334, 2.0
        %v423 = vmul.f32 %v339, 2.0
        %v424 = vmul.f32 %v342, 2.0
        %v425 = vmul.f32 %v347, 2.0
        %v426 = vmul.f32 %v350, 2.0
        %v427 = vmul.f32 %v355, 2.0
        %v428 = vmul.f32 %v358, 2.0
        %v429 = vsub.f32 %v397, %v413
        %v430 = vsub.f32 %v398, %v414
        %v431 = vsub.f32 %v399, %v415
        %v432 = vsub.f32 %v400, %v416
        %v433 = vsub.f32 %v401, %v417
        %v434 = vsub.f32 %v402, %v418
        %v435 = vsub.f32 %v403, %v419
        %v436 = vsub.f32 %v404, %v420
        %v437 = vsub.f32 %v405, %v421
        %v438 = vsub.f32 %v406, %v422
        %v439 = vsub.f32 %v407, %v423
        %v440 = vsub.f32 %v408, %v424
        %v441 = vsub.f32 %v409, %v425
        %v442 = vsub.f32 %v410, %v426
        %v443 = vsub.f32 %v411, %v427
        %v444 = vsub.f32 %v412, %v428
        %v445 = vmax.f32 %v429, 0.0
        %v446 = vmax.f32 %v430, 0.0
        %v447 = vmax.f32 %v431, 0.0
        %v448 = vmax.f32 %v432, 0.0
        %v449 = vmax.f32 %v433, 0.0
        %v450 = vmax.f32 %v434, 0.0
        %v451 = vmax.f32 %v435, 0.0
        %v452 = vmax.f32 %v436, 0.0
        %v453 = vmax.f32 %v437, 0.0
        %v454 = vmax.f32 %v438, 0.0
        %v455 = vmax.f32 %v439, 0.0
        %v456 = vmax.f32 %v440, 0.0
        %v457 = vmax.f32 %v441, 0.0
        %v458 = vmax.f32 %v442, 0.0
        %v459 = vmax.f32 %v443, 0.0
        %v460 = vmax.f32 %v444, 0.0
        %v461 = vlaneseq
        %v462 = vand.u32 %v461, 127
        %v479 = vand.u32 %v445, 4294967168
        %v480 = vand.u32 %v446, 4294967168
        %v481 = vand.u32 %v447, 4294967168
        %v482 = vand.u32 %v448, 4294967168
        %v483 = vand.u32 %v449, 4294967168
        %v484 = vand.u32 %v450, 4294967168
        %v485 = vand.u32 %v451, 4294967168
        %v486 = vand.u32 %v452, 4294967168
        %v487 = vand.u32 %v453, 4294967168
        %v488 = vand.u32 %v454, 4294967168
        %v489 = vand.u32 %v455, 4294967168
        %v490 = vand.u32 %v456, 4294967168
        %v491 = vand.u32 %v457, 4294967168
        %v492 = vand.u32 %v458, 4294967168
        %v493 = vand.u32 %v459, 4294967168
        %v494 = vand.u32 %v460, 4294967168
        %v495 = vor.u32 %v479, %v462
        %v496 = vor.u32 %v480, %v462
        %v497 = vor.u32 %v481, %v462
        %v498 = vor.u32 %v482, %v462
        %v499 = vor.u32 %v483, %v462
        %v500 = vor.u32 %v484, %v462
        %v501 = vor.u32 %v485, %v462
        %v502 = vor.u32 %v486, %v462
        %v503 = vor.u32 %v487, %v462
        %v504 = vor.u32 %v488, %v462
        %v505 = vor.u32 %v489, %v462
        %v506 = vor.u32 %v490, %v462
        %v507 = vor.u32 %v491, %v462
        %v508 = vor.u32 %v492, %v462
        %v509 = vor.u32 %v493, %v462
        %v510 = vor.u32 %v494, %v462
        %v511 = vmax.f32 %v445, %v449
        %v512 = vmax.f32 %v446, %v450
        %v513 = vmax.f32 %v447, %v451
        %v514 = vmax.f32 %v448, %v452
        %v515 = vmax.f32 %v511, %v453
        %v516 = vmax.f32 %v512, %v454
        %v517 = vmax.f32 %v513, %v455
        %v518 = vmax.f32 %v514, %v456
        %v519 = vmax.f32 %v515, %v457
        %v520 = vmax.f32 %v516, %v458
        %v521 = vmax.f32 %v517, %v459
        %v522 = vmax.f32 %v518, %v460
        %v523 = vmax.f32 %v519, %v520
        %v524 = vmax.f32 %v521, %v522
        %v525 = vmax.f32 %v523, %v524
        %526 = vmax.xlane.f32.xlu0 %v525
        %v527 = vpop.xlane.xlu0 %526
        %v528 = vrot.slane %v527, 4
        %v529 = vmax.f32 %v527, %v528
        %v530 = vrot.slane %v529, 2
        %v531 = vmax.f32 %v529, %v530
        %v532 = vrot.slane %v531, 1
        %v533 = vmax.f32 %v531, %v532
        %s534 = vtos %v533
        %v535 = vand.u32 %v495, 65535
        %v536 = vshra.s32 %v495, 16
        %v537 = vcvt.s32.f32 %v535
        %v538 = vcvt.s32.f32 %v536
        %539 = vmin.xlane.f32.xlu0 %v538
        %v540 = vpop.xlane.xlu0 %539
        %vm541 = vcmp.eq.f32.partialorder %v538, %v540
        %v542 = vsel %vm541, %v537, inf
        %543 = vmin.xlane.f32.xlu0 %v542
        %v544 = vpop.xlane.xlu0 %543
        %v545 = vcvt.f32.s32 %v544
        %v546 = vcvt.f32.s32 %v540
        %v547 = vshll.u32 %v546, 16
        %v548 = vadd.s32 %v547, %v545
        %v549 = vand.u32 %v496, 65535
        %v550 = vshra.s32 %v496, 16
        %v551 = vcvt.s32.f32 %v549
        %v552 = vcvt.s32.f32 %v550
        %553 = vmin.xlane.f32.xlu0 %v552
        %v554 = vpop.xlane.xlu0 %553
        %vm555 = vcmp.eq.f32.partialorder %v552, %v554
        %v556 = vsel %vm555, %v551, inf
        %557 = vmin.xlane.f32.xlu0 %v556
        %v558 = vpop.xlane.xlu0 %557
        %v559 = vcvt.f32.s32 %v558
        %v560 = vcvt.f32.s32 %v554
        %v561 = vshll.u32 %v560, 16
        %v562 = vadd.s32 %v561, %v559
        %v563 = vand.u32 %v497, 65535
        %v564 = vshra.s32 %v497, 16
        %v565 = vcvt.s32.f32 %v563
        %v566 = vcvt.s32.f32 %v564
        %567 = vmin.xlane.f32.xlu0 %v566
        %v568 = vpop.xlane.xlu0 %567
        %vm569 = vcmp.eq.f32.partialorder %v566, %v568
        %v570 = vsel %vm569, %v565, inf
        %571 = vmin.xlane.f32.xlu0 %v570
        %v572 = vpop.xlane.xlu0 %571
        %v573 = vcvt.f32.s32 %v572
        %v574 = vcvt.f32.s32 %v568
        %v575 = vshll.u32 %v574, 16
        %v576 = vadd.s32 %v575, %v573
        %v577 = vand.u32 %v498, 65535
        %v578 = vshra.s32 %v498, 16
        %v579 = vcvt.s32.f32 %v577
        %v580 = vcvt.s32.f32 %v578
        %581 = vmin.xlane.f32.xlu0 %v580
        %v582 = vpop.xlane.xlu0 %581
        %vm583 = vcmp.eq.f32.partialorder %v580, %v582
        %v584 = vsel %vm583, %v579, inf
        %585 = vmin.xlane.f32.xlu0 %v584
        %v586 = vpop.xlane.xlu0 %585
        %v587 = vcvt.f32.s32 %v586
        %v588 = vcvt.f32.s32 %v582
        %v589 = vshll.u32 %v588, 16
        %v590 = vadd.s32 %v589, %v587
        %v591 = vand.u32 %v499, 65535
        %v592 = vshra.s32 %v499, 16
        %v593 = vcvt.s32.f32 %v591
        %v594 = vcvt.s32.f32 %v592
        %595 = vmin.xlane.f32.xlu0 %v594
        %v596 = vpop.xlane.xlu0 %595
        %vm597 = vcmp.eq.f32.partialorder %v594, %v596
        %v598 = vsel %vm597, %v593, inf
        %599 = vmin.xlane.f32.xlu0 %v598
        %v600 = vpop.xlane.xlu0 %599
        %v601 = vcvt.f32.s32 %v600
        %v602 = vcvt.f32.s32 %v596
        %v603 = vshll.u32 %v602, 16
        %v604 = vadd.s32 %v603, %v601
        %v605 = vand.u32 %v500, 65535
        %v606 = vshra.s32 %v500, 16
        %v607 = vcvt.s32.f32 %v605
        %v608 = vcvt.s32.f32 %v606
        %609 = vmin.xlane.f32.xlu0 %v608
        %v610 = vpop.xlane.xlu0 %609
        %vm611 = vcmp.eq.f32.partialorder %v608, %v610
        %v612 = vsel %vm611, %v607, inf
        %613 = vmin.xlane.f32.xlu0 %v612
        %v614 = vpop.xlane.xlu0 %613
        %v615 = vcvt.f32.s32 %v614
        %v616 = vcvt.f32.s32 %v610
        %v617 = vshll.u32 %v616, 16
        %v618 = vadd.s32 %v617, %v615
        %v619 = vand.u32 %v501, 65535
        %v620 = vshra.s32 %v501, 16
        %v621 = vcvt.s32.f32 %v619
        %v622 = vcvt.s32.f32 %v620
        %623 = vmin.xlane.f32.xlu0 %v622
        %v624 = vpop.xlane.xlu0 %623
        %vm625 = vcmp.eq.f32.partialorder %v622, %v624
        %v626 = vsel %vm625, %v621, inf
        %627 = vmin.xlane.f32.xlu0 %v626
        %v628 = vpop.xlane.xlu0 %627
        %v629 = vcvt.f32.s32 %v628
        %v630 = vcvt.f32.s32 %v624
        %v631 = vshll.u32 %v630, 16
        %v632 = vadd.s32 %v631, %v629
        %v633 = vand.u32 %v502, 65535
        %v634 = vshra.s32 %v502, 16
        %v635 = vcvt.s32.f32 %v633
        %v636 = vcvt.s32.f32 %v634
        %637 = vmin.xlane.f32.xlu0 %v636
        %v638 = vpop.xlane.xlu0 %637
        %vm639 = vcmp.eq.f32.partialorder %v636, %v638
        %v640 = vsel %vm639, %v635, inf
        %641 = vmin.xlane.f32.xlu0 %v640
        %v642 = vpop.xlane.xlu0 %641
        %v643 = vcvt.f32.s32 %v642
        %v644 = vcvt.f32.s32 %v638
        %v645 = vshll.u32 %v644, 16
        %v646 = vadd.s32 %v645, %v643
        %v647 = vand.u32 %v503, 65535
        %v648 = vshra.s32 %v503, 16
        %v649 = vcvt.s32.f32 %v647
        %v650 = vcvt.s32.f32 %v648
        %651 = vmin.xlane.f32.xlu0 %v650
        %v652 = vpop.xlane.xlu0 %651
        %vm653 = vcmp.eq.f32.partialorder %v650, %v652
        %v654 = vsel %vm653, %v649, inf
        %655 = vmin.xlane.f32.xlu0 %v654
        %v656 = vpop.xlane.xlu0 %655
        %v657 = vcvt.f32.s32 %v656
        %v658 = vcvt.f32.s32 %v652
        %v659 = vshll.u32 %v658, 16
        %v660 = vadd.s32 %v659, %v657
        %v661 = vand.u32 %v504, 65535
        %v662 = vshra.s32 %v504, 16
        %v663 = vcvt.s32.f32 %v661
        %v664 = vcvt.s32.f32 %v662
        %665 = vmin.xlane.f32.xlu0 %v664
        %v666 = vpop.xlane.xlu0 %665
        %vm667 = vcmp.eq.f32.partialorder %v664, %v666
        %v668 = vsel %vm667, %v663, inf
        %669 = vmin.xlane.f32.xlu0 %v668
        %v670 = vpop.xlane.xlu0 %669
        %v671 = vcvt.f32.s32 %v670
        %v672 = vcvt.f32.s32 %v666
        %v673 = vshll.u32 %v672, 16
        %v674 = vadd.s32 %v673, %v671
        %v675 = vand.u32 %v505, 65535
        %v676 = vshra.s32 %v505, 16
        %v677 = vcvt.s32.f32 %v675
        %v678 = vcvt.s32.f32 %v676
        %679 = vmin.xlane.f32.xlu0 %v678
        %v680 = vpop.xlane.xlu0 %679
        %vm681 = vcmp.eq.f32.partialorder %v678, %v680
        %v682 = vsel %vm681, %v677, inf
        %683 = vmin.xlane.f32.xlu0 %v682
        %v684 = vpop.xlane.xlu0 %683
        %v685 = vcvt.f32.s32 %v684
        %v686 = vcvt.f32.s32 %v680
        %v687 = vshll.u32 %v686, 16
        %v688 = vadd.s32 %v687, %v685
        %v689 = vand.u32 %v506, 65535
        %v690 = vshra.s32 %v506, 16
        %v691 = vcvt.s32.f32 %v689
        %v692 = vcvt.s32.f32 %v690
        %693 = vmin.xlane.f32.xlu0 %v692
        %v694 = vpop.xlane.xlu0 %693
        %vm695 = vcmp.eq.f32.partialorder %v692, %v694
        %v696 = vsel %vm695, %v691, inf
        %697 = vmin.xlane.f32.xlu0 %v696
        %v698 = vpop.xlane.xlu0 %697
        %v699 = vcvt.f32.s32 %v698
        %v700 = vcvt.f32.s32 %v694
        %v701 = vshll.u32 %v700, 16
        %v702 = vadd.s32 %v701, %v699
        %v703 = vand.u32 %v507, 65535
        %v704 = vshra.s32 %v507, 16
        %v705 = vcvt.s32.f32 %v703
        %v706 = vcvt.s32.f32 %v704
        %707 = vmin.xlane.f32.xlu0 %v706
        %v708 = vpop.xlane.xlu0 %707
        %vm709 = vcmp.eq.f32.partialorder %v706, %v708
        %v710 = vsel %vm709, %v705, inf
        %711 = vmin.xlane.f32.xlu0 %v710
        %v712 = vpop.xlane.xlu0 %711
        %v713 = vcvt.f32.s32 %v712
        %v714 = vcvt.f32.s32 %v708
        %v715 = vshll.u32 %v714, 16
        %v716 = vadd.s32 %v715, %v713
        %v717 = vand.u32 %v508, 65535
        %v718 = vshra.s32 %v508, 16
        %v719 = vcvt.s32.f32 %v717
        %v720 = vcvt.s32.f32 %v718
        %721 = vmin.xlane.f32.xlu0 %v720
        %v722 = vpop.xlane.xlu0 %721
        %vm723 = vcmp.eq.f32.partialorder %v720, %v722
        %v724 = vsel %vm723, %v719, inf
        %725 = vmin.xlane.f32.xlu0 %v724
        %v726 = vpop.xlane.xlu0 %725
        %v727 = vcvt.f32.s32 %v726
        %v728 = vcvt.f32.s32 %v722
        %v729 = vshll.u32 %v728, 16
        %v730 = vadd.s32 %v729, %v727
        %v731 = vand.u32 %v509, 65535
        %v732 = vshra.s32 %v509, 16
        %v733 = vcvt.s32.f32 %v731
        %v734 = vcvt.s32.f32 %v732
        %735 = vmin.xlane.f32.xlu0 %v734
        %v736 = vpop.xlane.xlu0 %735
        %vm737 = vcmp.eq.f32.partialorder %v734, %v736
        %v738 = vsel %vm737, %v733, inf
        %739 = vmin.xlane.f32.xlu0 %v738
        %v740 = vpop.xlane.xlu0 %739
        %v741 = vcvt.f32.s32 %v740
        %v742 = vcvt.f32.s32 %v736
        %v743 = vshll.u32 %v742, 16
        %v744 = vadd.s32 %v743, %v741
        %v745 = vand.u32 %v510, 65535
        %v746 = vshra.s32 %v510, 16
        %v747 = vcvt.s32.f32 %v745
        %v748 = vcvt.s32.f32 %v746
        %749 = vmin.xlane.f32.xlu0 %v748
        %v750 = vpop.xlane.xlu0 %749
        %vm751 = vcmp.eq.f32.partialorder %v748, %v750
        %v752 = vsel %vm751, %v747, inf
        %753 = vmin.xlane.f32.xlu0 %v752
        %v754 = vpop.xlane.xlu0 %753
        %v755 = vcvt.f32.s32 %v754
        %v756 = vcvt.f32.s32 %v750
        %v757 = vshll.u32 %v756, 16
        %v758 = vadd.s32 %v757, %v755
        %v759 = vand.u32 %v548, 4294967168
        %v760 = vand.u32 %v562, 4294967168
        %v761 = vand.u32 %v576, 4294967168
        %v762 = vand.u32 %v590, 4294967168
        %v763 = vand.u32 %v604, 4294967168
        %v764 = vand.u32 %v618, 4294967168
        %v765 = vand.u32 %v632, 4294967168
        %v766 = vand.u32 %v646, 4294967168
        %v767 = vand.u32 %v660, 4294967168
        %v768 = vand.u32 %v674, 4294967168
        %v769 = vand.u32 %v688, 4294967168
        %v770 = vand.u32 %v702, 4294967168
        %v771 = vand.u32 %v716, 4294967168
        %v772 = vand.u32 %v730, 4294967168
        %v773 = vand.u32 %v744, 4294967168
        %v774 = vand.u32 %v758, 4294967168
        %v791 = vadd.f32 %v759, 0.0
        %v792 = vadd.f32 %v760, 0.0
        %v793 = vadd.f32 %v761, 0.0
        %v794 = vadd.f32 %v762, 0.0
        %v795 = vadd.f32 %v763, 0.0
        %v796 = vadd.f32 %v764, 0.0
        %v797 = vadd.f32 %v765, 0.0
        %v798 = vadd.f32 %v766, 0.0
        %v799 = vadd.f32 %v767, 0.0
        %v800 = vadd.f32 %v768, 0.0
        %v801 = vadd.f32 %v769, 0.0
        %v802 = vadd.f32 %v770, 0.0
        %v803 = vadd.f32 %v771, 0.0
        %v804 = vadd.f32 %v772, 0.0
        %v805 = vadd.f32 %v773, 0.0
        %v806 = vadd.f32 %v774, 0.0
        %vm807 = vcmp.eq.s32.totalorder %v495, %v548
        %vm808 = vcmp.eq.s32.totalorder %v496, %v562
        %vm809 = vcmp.eq.s32.totalorder %v497, %v576
        %vm810 = vcmp.eq.s32.totalorder %v498, %v590
        %vm811 = vcmp.eq.s32.totalorder %v499, %v604
        %vm812 = vcmp.eq.s32.totalorder %v500, %v618
        %vm813 = vcmp.eq.s32.totalorder %v501, %v632
        %vm814 = vcmp.eq.s32.totalorder %v502, %v646
        %vm815 = vcmp.eq.s32.totalorder %v503, %v660
        %vm816 = vcmp.eq.s32.totalorder %v504, %v674
        %vm817 = vcmp.eq.s32.totalorder %v505, %v688
        %vm818 = vcmp.eq.s32.totalorder %v506, %v702
        %vm819 = vcmp.eq.s32.totalorder %v507, %v716
        %vm820 = vcmp.eq.s32.totalorder %v508, %v730
        %vm821 = vcmp.eq.s32.totalorder %v509, %v744
        %vm822 = vcmp.eq.s32.totalorder %v510, %v758
        %v823 = vsel %vm807, 2147483647, %v495
        %v824 = vsel %vm808, 2147483647, %v496
        %v825 = vsel %vm809, 2147483647, %v497
        %v826 = vsel %vm810, 2147483647, %v498
        %v827 = vsel %vm811, 2147483647, %v499
        %v828 = vsel %vm812, 2147483647, %v500
        %v829 = vsel %vm813, 2147483647, %v501
        %v830 = vsel %vm814, 2147483647, %v502
        %v831 = vsel %vm815, 2147483647, %v503
        %v832 = vsel %vm816, 2147483647, %v504
        %v833 = vsel %vm817, 2147483647, %v505
        %v834 = vsel %vm818, 2147483647, %v506
        %v835 = vsel %vm819, 2147483647, %v507
        %v836 = vsel %vm820, 2147483647, %v508
        %v837 = vsel %vm821, 2147483647, %v509
        %v838 = vsel %vm822, 2147483647, %v510
        %v839 = vand.u32 %v823, 65535
        %v840 = vshra.s32 %v823, 16
        %v841 = vcvt.s32.f32 %v839
        %v842 = vcvt.s32.f32 %v840
        %843 = vmin.xlane.f32.xlu0 %v842
        %v844 = vpop.xlane.xlu0 %843
        %vm845 = vcmp.eq.f32.partialorder %v842, %v844
        %v846 = vsel %vm845, %v841, inf
        %847 = vmin.xlane.f32.xlu0 %v846
        %v848 = vpop.xlane.xlu0 %847
        %v849 = vcvt.f32.s32 %v848
        %v850 = vcvt.f32.s32 %v844
        %v851 = vshll.u32 %v850, 16
        %v852 = vadd.s32 %v851, %v849
        %v853 = vand.u32 %v824, 65535
        %v854 = vshra.s32 %v824, 16
        %v855 = vcvt.s32.f32 %v853
        %v856 = vcvt.s32.f32 %v854
        %857 = vmin.xlane.f32.xlu0 %v856
        %v858 = vpop.xlane.xlu0 %857
        %vm859 = vcmp.eq.f32.partialorder %v856, %v858
        %v860 = vsel %vm859, %v855, inf
        %861 = vmin.xlane.f32.xlu0 %v860
        %v862 = vpop.xlane.xlu0 %861
        %v863 = vcvt.f32.s32 %v862
        %v864 = vcvt.f32.s32 %v858
        %v865 = vshll.u32 %v864, 16
        %v866 = vadd.s32 %v865, %v863
        %v867 = vand.u32 %v825, 65535
        %v868 = vshra.s32 %v825, 16
        %v869 = vcvt.s32.f32 %v867
        %v870 = vcvt.s32.f32 %v868
        %871 = vmin.xlane.f32.xlu0 %v870
        %v872 = vpop.xlane.xlu0 %871
        %vm873 = vcmp.eq.f32.partialorder %v870, %v872
        %v874 = vsel %vm873, %v869, inf
        %875 = vmin.xlane.f32.xlu0 %v874
        %v876 = vpop.xlane.xlu0 %875
        %v877 = vcvt.f32.s32 %v876
        %v878 = vcvt.f32.s32 %v872
        %v879 = vshll.u32 %v878, 16
        %v880 = vadd.s32 %v879, %v877
        %v881 = vand.u32 %v826, 65535
        %v882 = vshra.s32 %v826, 16
        %v883 = vcvt.s32.f32 %v881
        %v884 = vcvt.s32.f32 %v882
        %885 = vmin.xlane.f32.xlu0 %v884
        %v886 = vpop.xlane.xlu0 %885
        %vm887 = vcmp.eq.f32.partialorder %v884, %v886
        %v888 = vsel %vm887, %v883, inf
        %889 = vmin.xlane.f32.xlu0 %v888
        %v890 = vpop.xlane.xlu0 %889
        %v891 = vcvt.f32.s32 %v890
        %v892 = vcvt.f32.s32 %v886
        %v893 = vshll.u32 %v892, 16
        %v894 = vadd.s32 %v893, %v891
        %v895 = vand.u32 %v827, 65535
        %v896 = vshra.s32 %v827, 16
        %v897 = vcvt.s32.f32 %v895
        %v898 = vcvt.s32.f32 %v896
        %899 = vmin.xlane.f32.xlu0 %v898
        %v900 = vpop.xlane.xlu0 %899
        %vm901 = vcmp.eq.f32.partialorder %v898, %v900
        %v902 = vsel %vm901, %v897, inf
        %903 = vmin.xlane.f32.xlu0 %v902
        %v904 = vpop.xlane.xlu0 %903
        %v905 = vcvt.f32.s32 %v904
        %v906 = vcvt.f32.s32 %v900
        %v907 = vshll.u32 %v906, 16
        %v908 = vadd.s32 %v907, %v905
        %v909 = vand.u32 %v828, 65535
        %v910 = vshra.s32 %v828, 16
        %v911 = vcvt.s32.f32 %v909
        %v912 = vcvt.s32.f32 %v910
        %913 = vmin.xlane.f32.xlu0 %v912
        %v914 = vpop.xlane.xlu0 %913
        %vm915 = vcmp.eq.f32.partialorder %v912, %v914
        %v916 = vsel %vm915, %v911, inf
        %917 = vmin.xlane.f32.xlu0 %v916
        %v918 = vpop.xlane.xlu0 %917
        %v919 = vcvt.f32.s32 %v918
        %v920 = vcvt.f32.s32 %v914
        %v921 = vshll.u32 %v920, 16
        %v922 = vadd.s32 %v921, %v919
        %v923 = vand.u32 %v829, 65535
        %v924 = vshra.s32 %v829, 16
        %v925 = vcvt.s32.f32 %v923
        %v926 = vcvt.s32.f32 %v924
        %927 = vmin.xlane.f32.xlu0 %v926
        %v928 = vpop.xlane.xlu0 %927
        %vm929 = vcmp.eq.f32.partialorder %v926, %v928
        %v930 = vsel %vm929, %v925, inf
        %931 = vmin.xlane.f32.xlu0 %v930
        %v932 = vpop.xlane.xlu0 %931
        %v933 = vcvt.f32.s32 %v932
        %v934 = vcvt.f32.s32 %v928
        %v935 = vshll.u32 %v934, 16
        %v936 = vadd.s32 %v935, %v933
        %v937 = vand.u32 %v830, 65535
        %v938 = vshra.s32 %v830, 16
        %v939 = vcvt.s32.f32 %v937
        %v940 = vcvt.s32.f32 %v938
        %941 = vmin.xlane.f32.xlu0 %v940
        %v942 = vpop.xlane.xlu0 %941
        %vm943 = vcmp.eq.f32.partialorder %v940, %v942
        %v944 = vsel %vm943, %v939, inf
        %945 = vmin.xlane.f32.xlu0 %v944
        %v946 = vpop.xlane.xlu0 %945
        %v947 = vcvt.f32.s32 %v946
        %v948 = vcvt.f32.s32 %v942
        %v949 = vshll.u32 %v948, 16
        %v950 = vadd.s32 %v949, %v947
        %v951 = vand.u32 %v831, 65535
        %v952 = vshra.s32 %v831, 16
        %v953 = vcvt.s32.f32 %v951
        %v954 = vcvt.s32.f32 %v952
        %955 = vmin.xlane.f32.xlu0 %v954
        %v956 = vpop.xlane.xlu0 %955
        %vm957 = vcmp.eq.f32.partialorder %v954, %v956
        %v958 = vsel %vm957, %v953, inf
        %959 = vmin.xlane.f32.xlu0 %v958
        %v960 = vpop.xlane.xlu0 %959
        %v961 = vcvt.f32.s32 %v960
        %v962 = vcvt.f32.s32 %v956
        %v963 = vshll.u32 %v962, 16
        %v964 = vadd.s32 %v963, %v961
        %v965 = vand.u32 %v832, 65535
        %v966 = vshra.s32 %v832, 16
        %v967 = vcvt.s32.f32 %v965
        %v968 = vcvt.s32.f32 %v966
        %969 = vmin.xlane.f32.xlu0 %v968
        %v970 = vpop.xlane.xlu0 %969
        %vm971 = vcmp.eq.f32.partialorder %v968, %v970
        %v972 = vsel %vm971, %v967, inf
        %973 = vmin.xlane.f32.xlu0 %v972
        %v974 = vpop.xlane.xlu0 %973
        %v975 = vcvt.f32.s32 %v974
        %v976 = vcvt.f32.s32 %v970
        %v977 = vshll.u32 %v976, 16
        %v978 = vadd.s32 %v977, %v975
        %v979 = vand.u32 %v833, 65535
        %v980 = vshra.s32 %v833, 16
        %v981 = vcvt.s32.f32 %v979
        %v982 = vcvt.s32.f32 %v980
        %983 = vmin.xlane.f32.xlu0 %v982
        %v984 = vpop.xlane.xlu0 %983
        %vm985 = vcmp.eq.f32.partialorder %v982, %v984
        %v986 = vsel %vm985, %v981, inf
        %987 = vmin.xlane.f32.xlu0 %v986
        %v988 = vpop.xlane.xlu0 %987
        %v989 = vcvt.f32.s32 %v988
        %v990 = vcvt.f32.s32 %v984
        %v991 = vshll.u32 %v990, 16
        %v992 = vadd.s32 %v991, %v989
        %v993 = vand.u32 %v834, 65535
        %v994 = vshra.s32 %v834, 16
        %v995 = vcvt.s32.f32 %v993
        %v996 = vcvt.s32.f32 %v994
        %997 = vmin.xlane.f32.xlu0 %v996
        %v998 = vpop.xlane.xlu0 %997
        %vm999 = vcmp.eq.f32.partialorder %v996, %v998
        %v1000 = vsel %vm999, %v995, inf
        %1001 = vmin.xlane.f32.xlu0 %v1000
        %v1002 = vpop.xlane.xlu0 %1001
        %v1003 = vcvt.f32.s32 %v1002
        %v1004 = vcvt.f32.s32 %v998
        %v1005 = vshll.u32 %v1004, 16
        %v1006 = vadd.s32 %v1005, %v1003
        %v1007 = vand.u32 %v835, 65535
        %v1008 = vshra.s32 %v835, 16
        %v1009 = vcvt.s32.f32 %v1007
        %v1010 = vcvt.s32.f32 %v1008
        %1011 = vmin.xlane.f32.xlu0 %v1010
        %v1012 = vpop.xlane.xlu0 %1011
        %vm1013 = vcmp.eq.f32.partialorder %v1010, %v1012
        %v1014 = vsel %vm1013, %v1009, inf
        %1015 = vmin.xlane.f32.xlu0 %v1014
        %v1016 = vpop.xlane.xlu0 %1015
        %v1017 = vcvt.f32.s32 %v1016
        %v1018 = vcvt.f32.s32 %v1012
        %v1019 = vshll.u32 %v1018, 16
        %v1020 = vadd.s32 %v1019, %v1017
        %v1021 = vand.u32 %v836, 65535
        %v1022 = vshra.s32 %v836, 16
        %v1023 = vcvt.s32.f32 %v1021
        %v1024 = vcvt.s32.f32 %v1022
        %1025 = vmin.xlane.f32.xlu0 %v1024
        %v1026 = vpop.xlane.xlu0 %1025
        %vm1027 = vcmp.eq.f32.partialorder %v1024, %v1026
        %v1028 = vsel %vm1027, %v1023, inf
        %1029 = vmin.xlane.f32.xlu0 %v1028
        %v1030 = vpop.xlane.xlu0 %1029
        %v1031 = vcvt.f32.s32 %v1030
        %v1032 = vcvt.f32.s32 %v1026
        %v1033 = vshll.u32 %v1032, 16
        %v1034 = vadd.s32 %v1033, %v1031
        %v1035 = vand.u32 %v837, 65535
        %v1036 = vshra.s32 %v837, 16
        %v1037 = vcvt.s32.f32 %v1035
        %v1038 = vcvt.s32.f32 %v1036
        %1039 = vmin.xlane.f32.xlu0 %v1038
        %v1040 = vpop.xlane.xlu0 %1039
        %vm1041 = vcmp.eq.f32.partialorder %v1038, %v1040
        %v1042 = vsel %vm1041, %v1037, inf
        %1043 = vmin.xlane.f32.xlu0 %v1042
        %v1044 = vpop.xlane.xlu0 %1043
        %v1045 = vcvt.f32.s32 %v1044
        %v1046 = vcvt.f32.s32 %v1040
        %v1047 = vshll.u32 %v1046, 16
        %v1048 = vadd.s32 %v1047, %v1045
        %v1049 = vand.u32 %v838, 65535
        %v1050 = vshra.s32 %v838, 16
        %v1051 = vcvt.s32.f32 %v1049
        %v1052 = vcvt.s32.f32 %v1050
        %1053 = vmin.xlane.f32.xlu0 %v1052
        %v1054 = vpop.xlane.xlu0 %1053
        %vm1055 = vcmp.eq.f32.partialorder %v1052, %v1054
        %v1056 = vsel %vm1055, %v1051, inf
        %1057 = vmin.xlane.f32.xlu0 %v1056
        %v1058 = vpop.xlane.xlu0 %1057
        %v1059 = vcvt.f32.s32 %v1058
        %v1060 = vcvt.f32.s32 %v1054
        %v1061 = vshll.u32 %v1060, 16
        %v1062 = vadd.s32 %v1061, %v1059
        %v1063 = vand.u32 %v852, 4294967168
        %v1064 = vand.u32 %v866, 4294967168
        %v1065 = vand.u32 %v880, 4294967168
        %v1066 = vand.u32 %v894, 4294967168
        %v1067 = vand.u32 %v908, 4294967168
        %v1068 = vand.u32 %v922, 4294967168
        %v1069 = vand.u32 %v936, 4294967168
        %v1070 = vand.u32 %v950, 4294967168
        %v1071 = vand.u32 %v964, 4294967168
        %v1072 = vand.u32 %v978, 4294967168
        %v1073 = vand.u32 %v992, 4294967168
        %v1074 = vand.u32 %v1006, 4294967168
        %v1075 = vand.u32 %v1020, 4294967168
        %v1076 = vand.u32 %v1034, 4294967168
        %v1077 = vand.u32 %v1048, 4294967168
        %v1078 = vand.u32 %v1062, 4294967168
        %v1095 = vadd.f32 %v791, %v1063
        %v1096 = vadd.f32 %v792, %v1064
        %v1097 = vadd.f32 %v793, %v1065
        %v1098 = vadd.f32 %v794, %v1066
        %v1099 = vadd.f32 %v795, %v1067
        %v1100 = vadd.f32 %v796, %v1068
        %v1101 = vadd.f32 %v797, %v1069
        %v1102 = vadd.f32 %v798, %v1070
        %v1103 = vadd.f32 %v799, %v1071
        %v1104 = vadd.f32 %v800, %v1072
        %v1105 = vadd.f32 %v801, %v1073
        %v1106 = vadd.f32 %v802, %v1074
        %v1107 = vadd.f32 %v803, %v1075
        %v1108 = vadd.f32 %v804, %v1076
        %v1109 = vadd.f32 %v805, %v1077
        %v1110 = vadd.f32 %v806, %v1078
        %vm1111 = vcmp.eq.s32.totalorder %v823, %v852
        %vm1112 = vcmp.eq.s32.totalorder %v824, %v866
        %vm1113 = vcmp.eq.s32.totalorder %v825, %v880
        %vm1114 = vcmp.eq.s32.totalorder %v826, %v894
        %vm1115 = vcmp.eq.s32.totalorder %v827, %v908
        %vm1116 = vcmp.eq.s32.totalorder %v828, %v922
        %vm1117 = vcmp.eq.s32.totalorder %v829, %v936
        %vm1118 = vcmp.eq.s32.totalorder %v830, %v950
        %vm1119 = vcmp.eq.s32.totalorder %v831, %v964
        %vm1120 = vcmp.eq.s32.totalorder %v832, %v978
        %vm1121 = vcmp.eq.s32.totalorder %v833, %v992
        %vm1122 = vcmp.eq.s32.totalorder %v834, %v1006
        %vm1123 = vcmp.eq.s32.totalorder %v835, %v1020
        %vm1124 = vcmp.eq.s32.totalorder %v836, %v1034
        %vm1125 = vcmp.eq.s32.totalorder %v837, %v1048
        %vm1126 = vcmp.eq.s32.totalorder %v838, %v1062
        %v1127 = vsel %vm1111, 2147483647, %v823
        %v1128 = vsel %vm1112, 2147483647, %v824
        %v1129 = vsel %vm1113, 2147483647, %v825
        %v1130 = vsel %vm1114, 2147483647, %v826
        %v1131 = vsel %vm1115, 2147483647, %v827
        %v1132 = vsel %vm1116, 2147483647, %v828
        %v1133 = vsel %vm1117, 2147483647, %v829
        %v1134 = vsel %vm1118, 2147483647, %v830
        %v1135 = vsel %vm1119, 2147483647, %v831
        %v1136 = vsel %vm1120, 2147483647, %v832
        %v1137 = vsel %vm1121, 2147483647, %v833
        %v1138 = vsel %vm1122, 2147483647, %v834
        %v1139 = vsel %vm1123, 2147483647, %v835
        %v1140 = vsel %vm1124, 2147483647, %v836
        %v1141 = vsel %vm1125, 2147483647, %v837
        %v1142 = vsel %vm1126, 2147483647, %v838
        %v1143 = vand.u32 %v1127, 65535
        %v1144 = vshra.s32 %v1127, 16
        %v1145 = vcvt.s32.f32 %v1143
        %v1146 = vcvt.s32.f32 %v1144
        %1147 = vmin.xlane.f32.xlu0 %v1146
        %v1148 = vpop.xlane.xlu0 %1147
        %vm1149 = vcmp.eq.f32.partialorder %v1146, %v1148
        %v1150 = vsel %vm1149, %v1145, inf
        %1151 = vmin.xlane.f32.xlu0 %v1150
        %v1152 = vpop.xlane.xlu0 %1151
        %v1153 = vcvt.f32.s32 %v1152
        %v1154 = vcvt.f32.s32 %v1148
        %v1155 = vshll.u32 %v1154, 16
        %v1156 = vadd.s32 %v1155, %v1153
        %v1157 = vand.u32 %v1128, 65535
        %v1158 = vshra.s32 %v1128, 16
        %v1159 = vcvt.s32.f32 %v1157
        %v1160 = vcvt.s32.f32 %v1158
        %1161 = vmin.xlane.f32.xlu0 %v1160
        %v1162 = vpop.xlane.xlu0 %1161
        %vm1163 = vcmp.eq.f32.partialorder %v1160, %v1162
        %v1164 = vsel %vm1163, %v1159, inf
        %1165 = vmin.xlane.f32.xlu0 %v1164
        %v1166 = vpop.xlane.xlu0 %1165
        %v1167 = vcvt.f32.s32 %v1166
        %v1168 = vcvt.f32.s32 %v1162
        %v1169 = vshll.u32 %v1168, 16
        %v1170 = vadd.s32 %v1169, %v1167
        %v1171 = vand.u32 %v1129, 65535
        %v1172 = vshra.s32 %v1129, 16
        %v1173 = vcvt.s32.f32 %v1171
        %v1174 = vcvt.s32.f32 %v1172
        %1175 = vmin.xlane.f32.xlu0 %v1174
        %v1176 = vpop.xlane.xlu0 %1175
        %vm1177 = vcmp.eq.f32.partialorder %v1174, %v1176
        %v1178 = vsel %vm1177, %v1173, inf
        %1179 = vmin.xlane.f32.xlu0 %v1178
        %v1180 = vpop.xlane.xlu0 %1179
        %v1181 = vcvt.f32.s32 %v1180
        %v1182 = vcvt.f32.s32 %v1176
        %v1183 = vshll.u32 %v1182, 16
        %v1184 = vadd.s32 %v1183, %v1181
        %v1185 = vand.u32 %v1130, 65535
        %v1186 = vshra.s32 %v1130, 16
        %v1187 = vcvt.s32.f32 %v1185
        %v1188 = vcvt.s32.f32 %v1186
        %1189 = vmin.xlane.f32.xlu0 %v1188
        %v1190 = vpop.xlane.xlu0 %1189
        %vm1191 = vcmp.eq.f32.partialorder %v1188, %v1190
        %v1192 = vsel %vm1191, %v1187, inf
        %1193 = vmin.xlane.f32.xlu0 %v1192
        %v1194 = vpop.xlane.xlu0 %1193
        %v1195 = vcvt.f32.s32 %v1194
        %v1196 = vcvt.f32.s32 %v1190
        %v1197 = vshll.u32 %v1196, 16
        %v1198 = vadd.s32 %v1197, %v1195
        %v1199 = vand.u32 %v1131, 65535
        %v1200 = vshra.s32 %v1131, 16
        %v1201 = vcvt.s32.f32 %v1199
        %v1202 = vcvt.s32.f32 %v1200
        %1203 = vmin.xlane.f32.xlu0 %v1202
        %v1204 = vpop.xlane.xlu0 %1203
        %vm1205 = vcmp.eq.f32.partialorder %v1202, %v1204
        %v1206 = vsel %vm1205, %v1201, inf
        %1207 = vmin.xlane.f32.xlu0 %v1206
        %v1208 = vpop.xlane.xlu0 %1207
        %v1209 = vcvt.f32.s32 %v1208
        %v1210 = vcvt.f32.s32 %v1204
        %v1211 = vshll.u32 %v1210, 16
        %v1212 = vadd.s32 %v1211, %v1209
        %v1213 = vand.u32 %v1132, 65535
        %v1214 = vshra.s32 %v1132, 16
        %v1215 = vcvt.s32.f32 %v1213
        %v1216 = vcvt.s32.f32 %v1214
        %1217 = vmin.xlane.f32.xlu0 %v1216
        %v1218 = vpop.xlane.xlu0 %1217
        %vm1219 = vcmp.eq.f32.partialorder %v1216, %v1218
        %v1220 = vsel %vm1219, %v1215, inf
        %1221 = vmin.xlane.f32.xlu0 %v1220
        %v1222 = vpop.xlane.xlu0 %1221
        %v1223 = vcvt.f32.s32 %v1222
        %v1224 = vcvt.f32.s32 %v1218
        %v1225 = vshll.u32 %v1224, 16
        %v1226 = vadd.s32 %v1225, %v1223
        %v1227 = vand.u32 %v1133, 65535
        %v1228 = vshra.s32 %v1133, 16
        %v1229 = vcvt.s32.f32 %v1227
        %v1230 = vcvt.s32.f32 %v1228
        %1231 = vmin.xlane.f32.xlu0 %v1230
        %v1232 = vpop.xlane.xlu0 %1231
        %vm1233 = vcmp.eq.f32.partialorder %v1230, %v1232
        %v1234 = vsel %vm1233, %v1229, inf
        %1235 = vmin.xlane.f32.xlu0 %v1234
        %v1236 = vpop.xlane.xlu0 %1235
        %v1237 = vcvt.f32.s32 %v1236
        %v1238 = vcvt.f32.s32 %v1232
        %v1239 = vshll.u32 %v1238, 16
        %v1240 = vadd.s32 %v1239, %v1237
        %v1241 = vand.u32 %v1134, 65535
        %v1242 = vshra.s32 %v1134, 16
        %v1243 = vcvt.s32.f32 %v1241
        %v1244 = vcvt.s32.f32 %v1242
        %1245 = vmin.xlane.f32.xlu0 %v1244
        %v1246 = vpop.xlane.xlu0 %1245
        %vm1247 = vcmp.eq.f32.partialorder %v1244, %v1246
        %v1248 = vsel %vm1247, %v1243, inf
        %1249 = vmin.xlane.f32.xlu0 %v1248
        %v1250 = vpop.xlane.xlu0 %1249
        %v1251 = vcvt.f32.s32 %v1250
        %v1252 = vcvt.f32.s32 %v1246
        %v1253 = vshll.u32 %v1252, 16
        %v1254 = vadd.s32 %v1253, %v1251
        %v1255 = vand.u32 %v1135, 65535
        %v1256 = vshra.s32 %v1135, 16
        %v1257 = vcvt.s32.f32 %v1255
        %v1258 = vcvt.s32.f32 %v1256
        %1259 = vmin.xlane.f32.xlu0 %v1258
        %v1260 = vpop.xlane.xlu0 %1259
        %vm1261 = vcmp.eq.f32.partialorder %v1258, %v1260
        %v1262 = vsel %vm1261, %v1257, inf
        %1263 = vmin.xlane.f32.xlu0 %v1262
        %v1264 = vpop.xlane.xlu0 %1263
        %v1265 = vcvt.f32.s32 %v1264
        %v1266 = vcvt.f32.s32 %v1260
        %v1267 = vshll.u32 %v1266, 16
        %v1268 = vadd.s32 %v1267, %v1265
        %v1269 = vand.u32 %v1136, 65535
        %v1270 = vshra.s32 %v1136, 16
        %v1271 = vcvt.s32.f32 %v1269
        %v1272 = vcvt.s32.f32 %v1270
        %1273 = vmin.xlane.f32.xlu0 %v1272
        %v1274 = vpop.xlane.xlu0 %1273
        %vm1275 = vcmp.eq.f32.partialorder %v1272, %v1274
        %v1276 = vsel %vm1275, %v1271, inf
        %1277 = vmin.xlane.f32.xlu0 %v1276
        %v1278 = vpop.xlane.xlu0 %1277
        %v1279 = vcvt.f32.s32 %v1278
        %v1280 = vcvt.f32.s32 %v1274
        %v1281 = vshll.u32 %v1280, 16
        %v1282 = vadd.s32 %v1281, %v1279
        %v1283 = vand.u32 %v1137, 65535
        %v1284 = vshra.s32 %v1137, 16
        %v1285 = vcvt.s32.f32 %v1283
        %v1286 = vcvt.s32.f32 %v1284
        %1287 = vmin.xlane.f32.xlu0 %v1286
        %v1288 = vpop.xlane.xlu0 %1287
        %vm1289 = vcmp.eq.f32.partialorder %v1286, %v1288
        %v1290 = vsel %vm1289, %v1285, inf
        %1291 = vmin.xlane.f32.xlu0 %v1290
        %v1292 = vpop.xlane.xlu0 %1291
        %v1293 = vcvt.f32.s32 %v1292
        %v1294 = vcvt.f32.s32 %v1288
        %v1295 = vshll.u32 %v1294, 16
        %v1296 = vadd.s32 %v1295, %v1293
        %v1297 = vand.u32 %v1138, 65535
        %v1298 = vshra.s32 %v1138, 16
        %v1299 = vcvt.s32.f32 %v1297
        %v1300 = vcvt.s32.f32 %v1298
        %1301 = vmin.xlane.f32.xlu0 %v1300
        %v1302 = vpop.xlane.xlu0 %1301
        %vm1303 = vcmp.eq.f32.partialorder %v1300, %v1302
        %v1304 = vsel %vm1303, %v1299, inf
        %1305 = vmin.xlane.f32.xlu0 %v1304
        %v1306 = vpop.xlane.xlu0 %1305
        %v1307 = vcvt.f32.s32 %v1306
        %v1308 = vcvt.f32.s32 %v1302
        %v1309 = vshll.u32 %v1308, 16
        %v1310 = vadd.s32 %v1309, %v1307
        %v1311 = vand.u32 %v1139, 65535
        %v1312 = vshra.s32 %v1139, 16
        %v1313 = vcvt.s32.f32 %v1311
        %v1314 = vcvt.s32.f32 %v1312
        %1315 = vmin.xlane.f32.xlu0 %v1314
        %v1316 = vpop.xlane.xlu0 %1315
        %vm1317 = vcmp.eq.f32.partialorder %v1314, %v1316
        %v1318 = vsel %vm1317, %v1313, inf
        %1319 = vmin.xlane.f32.xlu0 %v1318
        %v1320 = vpop.xlane.xlu0 %1319
        %v1321 = vcvt.f32.s32 %v1320
        %v1322 = vcvt.f32.s32 %v1316
        %v1323 = vshll.u32 %v1322, 16
        %v1324 = vadd.s32 %v1323, %v1321
        %v1325 = vand.u32 %v1140, 65535
        %v1326 = vshra.s32 %v1140, 16
        %v1327 = vcvt.s32.f32 %v1325
        %v1328 = vcvt.s32.f32 %v1326
        %1329 = vmin.xlane.f32.xlu0 %v1328
        %v1330 = vpop.xlane.xlu0 %1329
        %vm1331 = vcmp.eq.f32.partialorder %v1328, %v1330
        %v1332 = vsel %vm1331, %v1327, inf
        %1333 = vmin.xlane.f32.xlu0 %v1332
        %v1334 = vpop.xlane.xlu0 %1333
        %v1335 = vcvt.f32.s32 %v1334
        %v1336 = vcvt.f32.s32 %v1330
        %v1337 = vshll.u32 %v1336, 16
        %v1338 = vadd.s32 %v1337, %v1335
        %v1339 = vand.u32 %v1141, 65535
        %v1340 = vshra.s32 %v1141, 16
        %v1341 = vcvt.s32.f32 %v1339
        %v1342 = vcvt.s32.f32 %v1340
        %1343 = vmin.xlane.f32.xlu0 %v1342
        %v1344 = vpop.xlane.xlu0 %1343
        %vm1345 = vcmp.eq.f32.partialorder %v1342, %v1344
        %v1346 = vsel %vm1345, %v1341, inf
        %1347 = vmin.xlane.f32.xlu0 %v1346
        %v1348 = vpop.xlane.xlu0 %1347
        %v1349 = vcvt.f32.s32 %v1348
        %v1350 = vcvt.f32.s32 %v1344
        %v1351 = vshll.u32 %v1350, 16
        %v1352 = vadd.s32 %v1351, %v1349
        %v1353 = vand.u32 %v1142, 65535
        %v1354 = vshra.s32 %v1142, 16
        %v1355 = vcvt.s32.f32 %v1353
        %v1356 = vcvt.s32.f32 %v1354
        %1357 = vmin.xlane.f32.xlu0 %v1356
        %v1358 = vpop.xlane.xlu0 %1357
        %vm1359 = vcmp.eq.f32.partialorder %v1356, %v1358
        %v1360 = vsel %vm1359, %v1355, inf
        %1361 = vmin.xlane.f32.xlu0 %v1360
        %v1362 = vpop.xlane.xlu0 %1361
        %v1363 = vcvt.f32.s32 %v1362
        %v1364 = vcvt.f32.s32 %v1358
        %v1365 = vshll.u32 %v1364, 16
        %v1366 = vadd.s32 %v1365, %v1363
        %v1367 = vand.u32 %v1156, 4294967168
        %v1368 = vand.u32 %v1170, 4294967168
        %v1369 = vand.u32 %v1184, 4294967168
        %v1370 = vand.u32 %v1198, 4294967168
        %v1371 = vand.u32 %v1212, 4294967168
        %v1372 = vand.u32 %v1226, 4294967168
        %v1373 = vand.u32 %v1240, 4294967168
        %v1374 = vand.u32 %v1254, 4294967168
        %v1375 = vand.u32 %v1268, 4294967168
        %v1376 = vand.u32 %v1282, 4294967168
        %v1377 = vand.u32 %v1296, 4294967168
        %v1378 = vand.u32 %v1310, 4294967168
        %v1379 = vand.u32 %v1324, 4294967168
        %v1380 = vand.u32 %v1338, 4294967168
        %v1381 = vand.u32 %v1352, 4294967168
        %v1382 = vand.u32 %v1366, 4294967168
        %v1399 = vadd.f32 %v1095, %v1367
        %v1400 = vadd.f32 %v1096, %v1368
        %v1401 = vadd.f32 %v1097, %v1369
        %v1402 = vadd.f32 %v1098, %v1370
        %v1403 = vadd.f32 %v1099, %v1371
        %v1404 = vadd.f32 %v1100, %v1372
        %v1405 = vadd.f32 %v1101, %v1373
        %v1406 = vadd.f32 %v1102, %v1374
        %v1407 = vadd.f32 %v1103, %v1375
        %v1408 = vadd.f32 %v1104, %v1376
        %v1409 = vadd.f32 %v1105, %v1377
        %v1410 = vadd.f32 %v1106, %v1378
        %v1411 = vadd.f32 %v1107, %v1379
        %v1412 = vadd.f32 %v1108, %v1380
        %v1413 = vadd.f32 %v1109, %v1381
        %v1414 = vadd.f32 %v1110, %v1382
        %vm1415 = vcmp.eq.s32.totalorder %v1127, %v1156
        %vm1416 = vcmp.eq.s32.totalorder %v1128, %v1170
        %vm1417 = vcmp.eq.s32.totalorder %v1129, %v1184
        %vm1418 = vcmp.eq.s32.totalorder %v1130, %v1198
        %vm1419 = vcmp.eq.s32.totalorder %v1131, %v1212
        %vm1420 = vcmp.eq.s32.totalorder %v1132, %v1226
        %vm1421 = vcmp.eq.s32.totalorder %v1133, %v1240
        %vm1422 = vcmp.eq.s32.totalorder %v1134, %v1254
        %vm1423 = vcmp.eq.s32.totalorder %v1135, %v1268
        %vm1424 = vcmp.eq.s32.totalorder %v1136, %v1282
        %vm1425 = vcmp.eq.s32.totalorder %v1137, %v1296
        %vm1426 = vcmp.eq.s32.totalorder %v1138, %v1310
        %vm1427 = vcmp.eq.s32.totalorder %v1139, %v1324
        %vm1428 = vcmp.eq.s32.totalorder %v1140, %v1338
        %vm1429 = vcmp.eq.s32.totalorder %v1141, %v1352
        %vm1430 = vcmp.eq.s32.totalorder %v1142, %v1366
        %v1431 = vsel %vm1415, 2147483647, %v1127
        %v1432 = vsel %vm1416, 2147483647, %v1128
        %v1433 = vsel %vm1417, 2147483647, %v1129
        %v1434 = vsel %vm1418, 2147483647, %v1130
        %v1435 = vsel %vm1419, 2147483647, %v1131
        %v1436 = vsel %vm1420, 2147483647, %v1132
        %v1437 = vsel %vm1421, 2147483647, %v1133
        %v1438 = vsel %vm1422, 2147483647, %v1134
        %v1439 = vsel %vm1423, 2147483647, %v1135
        %v1440 = vsel %vm1424, 2147483647, %v1136
        %v1441 = vsel %vm1425, 2147483647, %v1137
        %v1442 = vsel %vm1426, 2147483647, %v1138
        %v1443 = vsel %vm1427, 2147483647, %v1139
        %v1444 = vsel %vm1428, 2147483647, %v1140
        %v1445 = vsel %vm1429, 2147483647, %v1141
        %v1446 = vsel %vm1430, 2147483647, %v1142
        %v1447 = vsub.f32 0.0, %v1399
        %v1448 = vsub.f32 0.0, %v1400
        %v1449 = vsub.f32 0.0, %v1401
        %v1450 = vsub.f32 0.0, %v1402
        %v1451 = vsub.f32 0.0, %v1403
        %v1452 = vsub.f32 0.0, %v1404
        %v1453 = vsub.f32 0.0, %v1405
        %v1454 = vsub.f32 0.0, %v1406
        %v1455 = vsub.f32 0.0, %v1407
        %v1456 = vsub.f32 0.0, %v1408
        %v1457 = vsub.f32 0.0, %v1409
        %v1458 = vsub.f32 0.0, %v1410
        %v1459 = vsub.f32 0.0, %v1411
        %v1460 = vsub.f32 0.0, %v1412
        %v1461 = vsub.f32 0.0, %v1413
        %v1462 = vsub.f32 0.0, %v1414
        %v1463 = vrcp.pop 384.0
        %v1464 = vmul.f32 %v1447, %v1463
        %v1465 = vmul.f32 %v1448, %v1463
        %v1466 = vmul.f32 %v1449, %v1463
        %v1467 = vmul.f32 %v1450, %v1463
        %v1468 = vmul.f32 %v1451, %v1463
        %v1469 = vmul.f32 %v1452, %v1463
        %v1470 = vmul.f32 %v1453, %v1463
        %v1471 = vmul.f32 %v1454, %v1463
        %v1472 = vmul.f32 %v1455, %v1463
        %v1473 = vmul.f32 %v1456, %v1463
        %v1474 = vmul.f32 %v1457, %v1463
        %v1475 = vmul.f32 %v1458, %v1463
        %v1476 = vmul.f32 %v1459, %v1463
        %v1477 = vmul.f32 %v1460, %v1463
        %v1478 = vmul.f32 %v1461, %v1463
        %v1479 = vmul.f32 %v1462, %v1463
        %v1480 = vmul.f32 %v1464, 1.442695
        %v1481 = vpow.pop %v1480
        %v1482 = vmul.f32 %v1465, 1.442695
        %v1483 = vpow.pop %v1482
        %v1484 = vmul.f32 %v1466, 1.442695
        %v1485 = vpow.pop %v1484
        %v1486 = vmul.f32 %v1467, 1.442695
        %v1487 = vpow.pop %v1486
        %v1488 = vmul.f32 %v1468, 1.442695
        %v1489 = vpow.pop %v1488
        %v1490 = vmul.f32 %v1469, 1.442695
        %v1491 = vpow.pop %v1490
        %v1492 = vmul.f32 %v1470, 1.442695
        %v1493 = vpow.pop %v1492
        %v1494 = vmul.f32 %v1471, 1.442695
        %v1495 = vpow.pop %v1494
        %v1496 = vmul.f32 %v1472, 1.442695
        %v1497 = vpow.pop %v1496
        %v1498 = vmul.f32 %v1473, 1.442695
        %v1499 = vpow.pop %v1498
        %v1500 = vmul.f32 %v1474, 1.442695
        %v1501 = vpow.pop %v1500
        %v1502 = vmul.f32 %v1475, 1.442695
        %v1503 = vpow.pop %v1502
        %v1504 = vmul.f32 %v1476, 1.442695
        %v1505 = vpow.pop %v1504
        %v1506 = vmul.f32 %v1477, 1.442695
        %v1507 = vpow.pop %v1506
        %v1508 = vmul.f32 %v1478, 1.442695
        %v1509 = vpow.pop %v1508
        %v1510 = vmul.f32 %v1479, 1.442695
        %v1511 = vpow.pop %v1510
        %1512 = vxpose.xlu0.b32.start [1/16] %v1481, 128
        %1513 = vxpose.xlu0.b32.cont [2/16] %v1483, 128
        %1514 = vxpose.xlu0.b32.cont [3/16] %v1485, 128
        %1515 = vxpose.xlu0.b32.cont [4/16] %v1487, 128
        %1516 = vxpose.xlu0.b32.cont [5/16] %v1489, 128
        %1517 = vxpose.xlu0.b32.cont [6/16] %v1491, 128
        %1518 = vxpose.xlu0.b32.cont [7/16] %v1493, 128
        %1519 = vxpose.xlu0.b32.cont [8/16] %v1495, 128
        %1520 = vxpose.xlu0.b32.cont [9/16] %v1497, 128
        %1521 = vxpose.xlu0.b32.cont [10/16] %v1499, 128
        %1522 = vxpose.xlu0.b32.cont [11/16] %v1501, 128
        %1523 = vxpose.xlu0.b32.cont [12/16] %v1503, 128
        %1524 = vxpose.xlu0.b32.cont [13/16] %v1505, 128
        %1525 = vxpose.xlu0.b32.cont [14/16] %v1507, 128
        %1526 = vxpose.xlu0.b32.cont [15/16] %v1509, 128
        %1527 = vxpose.xlu0.b32.end [16/16] %v1511, 128
        %v1528 = vpop.trf.xlu0
        %v1529 = vpop.trf.xlu0
        %v1530 = vpop.trf.xlu0
        %v1531 = vpop.trf.xlu0
        %v1532 = vpop.trf.xlu0
        %v1533 = vpop.trf.xlu0
        %v1534 = vpop.trf.xlu0
        %v1535 = vpop.trf.xlu0
        %v1536 = vpop.trf.xlu0
        %v1537 = vpop.trf.xlu0
        %v1538 = vpop.trf.xlu0
        %v1539 = vpop.trf.xlu0
        %v1540 = vpop.trf.xlu0
        %v1541 = vpop.trf.xlu0
        %v1542 = vpop.trf.xlu0
        %v1543 = vpop.trf.xlu0
        %v1544 = vlaneseq
        %v1545 = vshrl.u32 %v1544, 7
        %v1546 = vsub.s32 0, %v1545
        %v1547 = vrot.slane %v1528, %v1546
        %vm1548 = vcmp.gt.f32.partialorder %v1547, %v1481
        %vm1549 = vcmp.gt.f32.partialorder %v1547, %v1483
        %vm1550 = vcmp.gt.f32.partialorder %v1547, %v1485
        %vm1551 = vcmp.gt.f32.partialorder %v1547, %v1487
        %vm1552 = vcmp.gt.f32.partialorder %v1547, %v1489
        %vm1553 = vcmp.gt.f32.partialorder %v1547, %v1491
        %vm1554 = vcmp.gt.f32.partialorder %v1547, %v1493
        %vm1555 = vcmp.gt.f32.partialorder %v1547, %v1495
        %vm1556 = vcmp.gt.f32.partialorder %v1547, %v1497
        %vm1557 = vcmp.gt.f32.partialorder %v1547, %v1499
        %vm1558 = vcmp.gt.f32.partialorder %v1547, %v1501
        %vm1559 = vcmp.gt.f32.partialorder %v1547, %v1503
        %vm1560 = vcmp.gt.f32.partialorder %v1547, %v1505
        %vm1561 = vcmp.gt.f32.partialorder %v1547, %v1507
        %vm1562 = vcmp.gt.f32.partialorder %v1547, %v1509
        %vm1563 = vcmp.gt.f32.partialorder %v1547, %v1511
        %v1564 = vstv %s534
        %v1565 = vsel %vm1548, %v445, %v1564
        %v1566 = vsel %vm1549, %v446, %v1564
        %v1567 = vsel %vm1550, %v447, %v1564
        %v1568 = vsel %vm1551, %v448, %v1564
        %v1569 = vsel %vm1552, %v449, %v1564
        %v1570 = vsel %vm1553, %v450, %v1564
        %v1571 = vsel %vm1554, %v451, %v1564
        %v1572 = vsel %vm1555, %v452, %v1564
        %v1573 = vsel %vm1556, %v453, %v1564
        %v1574 = vsel %vm1557, %v454, %v1564
        %v1575 = vsel %vm1558, %v455, %v1564
        %v1576 = vsel %vm1559, %v456, %v1564
        %v1577 = vsel %vm1560, %v457, %v1564
        %v1578 = vsel %vm1561, %v458, %v1564
        %v1579 = vsel %vm1562, %v459, %v1564
        %v1580 = vsel %vm1563, %v460, %v1564
        %1581 = vmin.xlane.f32.xlu0 %v1565
        %v1582 = vpop.xlane.xlu0 %1581
        %1583 = vmin.xlane.f32.xlu0 %v1566
        %v1584 = vpop.xlane.xlu0 %1583
        %1585 = vmin.xlane.f32.xlu0 %v1567
        %v1586 = vpop.xlane.xlu0 %1585
        %1587 = vmin.xlane.f32.xlu0 %v1568
        %v1588 = vpop.xlane.xlu0 %1587
        %1589 = vmin.xlane.f32.xlu0 %v1569
        %v1590 = vpop.xlane.xlu0 %1589
        %1591 = vmin.xlane.f32.xlu0 %v1570
        %v1592 = vpop.xlane.xlu0 %1591
        %1593 = vmin.xlane.f32.xlu0 %v1571
        %v1594 = vpop.xlane.xlu0 %1593
        %1595 = vmin.xlane.f32.xlu0 %v1572
        %v1596 = vpop.xlane.xlu0 %1595
        %1597 = vmin.xlane.f32.xlu0 %v1573
        %v1598 = vpop.xlane.xlu0 %1597
        %1599 = vmin.xlane.f32.xlu0 %v1574
        %v1600 = vpop.xlane.xlu0 %1599
        %1601 = vmin.xlane.f32.xlu0 %v1575
        %v1602 = vpop.xlane.xlu0 %1601
        %1603 = vmin.xlane.f32.xlu0 %v1576
        %v1604 = vpop.xlane.xlu0 %1603
        %1605 = vmin.xlane.f32.xlu0 %v1577
        %v1606 = vpop.xlane.xlu0 %1605
        %1607 = vmin.xlane.f32.xlu0 %v1578
        %v1608 = vpop.xlane.xlu0 %1607
        %1609 = vmin.xlane.f32.xlu0 %v1579
        %v1610 = vpop.xlane.xlu0 %1609
        %1611 = vmin.xlane.f32.xlu0 %v1580
        %v1612 = vpop.xlane.xlu0 %1611
        %v1613 = vrsqrt.pop %v1582
        %v1614 = vmul.f32 %v1582, %v1613
        %vm1615 = vcmp.eq.f32.partialorder %v1582, inf
        %v1616 = vsel %vm1615, %v1582, %v1614
        %vm1617 = vcmp.eq.f32.partialorder %v1582, 0.0
        %v1618 = vand.u32 %v1582, 2147483648
        %v1619 = vsel %vm1617, %v1618, %v1616
        %v1620 = vrsqrt.pop %v1584
        %v1621 = vmul.f32 %v1584, %v1620
        %vm1622 = vcmp.eq.f32.partialorder %v1584, inf
        %v1623 = vsel %vm1622, %v1584, %v1621
        %vm1624 = vcmp.eq.f32.partialorder %v1584, 0.0
        %v1625 = vand.u32 %v1584, 2147483648
        %v1626 = vsel %vm1624, %v1625, %v1623
        %v1627 = vrsqrt.pop %v1586
        %v1628 = vmul.f32 %v1586, %v1627
        %vm1629 = vcmp.eq.f32.partialorder %v1586, inf
        %v1630 = vsel %vm1629, %v1586, %v1628
        %vm1631 = vcmp.eq.f32.partialorder %v1586, 0.0
        %v1632 = vand.u32 %v1586, 2147483648
        %v1633 = vsel %vm1631, %v1632, %v1630
        %v1634 = vrsqrt.pop %v1588
        %v1635 = vmul.f32 %v1588, %v1634
        %vm1636 = vcmp.eq.f32.partialorder %v1588, inf
        %v1637 = vsel %vm1636, %v1588, %v1635
        %vm1638 = vcmp.eq.f32.partialorder %v1588, 0.0
        %v1639 = vand.u32 %v1588, 2147483648
        %v1640 = vsel %vm1638, %v1639, %v1637
        %v1641 = vrsqrt.pop %v1590
        %v1642 = vmul.f32 %v1590, %v1641
        %vm1643 = vcmp.eq.f32.partialorder %v1590, inf
        %v1644 = vsel %vm1643, %v1590, %v1642
        %vm1645 = vcmp.eq.f32.partialorder %v1590, 0.0
        %v1646 = vand.u32 %v1590, 2147483648
        %v1647 = vsel %vm1645, %v1646, %v1644
        %v1648 = vrsqrt.pop %v1592
        %v1649 = vmul.f32 %v1592, %v1648
        %vm1650 = vcmp.eq.f32.partialorder %v1592, inf
        %v1651 = vsel %vm1650, %v1592, %v1649
        %vm1652 = vcmp.eq.f32.partialorder %v1592, 0.0
        %v1653 = vand.u32 %v1592, 2147483648
        %v1654 = vsel %vm1652, %v1653, %v1651
        %v1655 = vrsqrt.pop %v1594
        %v1656 = vmul.f32 %v1594, %v1655
        %vm1657 = vcmp.eq.f32.partialorder %v1594, inf
        %v1658 = vsel %vm1657, %v1594, %v1656
        %vm1659 = vcmp.eq.f32.partialorder %v1594, 0.0
        %v1660 = vand.u32 %v1594, 2147483648
        %v1661 = vsel %vm1659, %v1660, %v1658
        %v1662 = vrsqrt.pop %v1596
        %v1663 = vmul.f32 %v1596, %v1662
        %vm1664 = vcmp.eq.f32.partialorder %v1596, inf
        %v1665 = vsel %vm1664, %v1596, %v1663
        %vm1666 = vcmp.eq.f32.partialorder %v1596, 0.0
        %v1667 = vand.u32 %v1596, 2147483648
        %v1668 = vsel %vm1666, %v1667, %v1665
        %v1669 = vrsqrt.pop %v1598
        %v1670 = vmul.f32 %v1598, %v1669
        %vm1671 = vcmp.eq.f32.partialorder %v1598, inf
        %v1672 = vsel %vm1671, %v1598, %v1670
        %vm1673 = vcmp.eq.f32.partialorder %v1598, 0.0
        %v1674 = vand.u32 %v1598, 2147483648
        %v1675 = vsel %vm1673, %v1674, %v1672
        %v1676 = vrsqrt.pop %v1600
        %v1677 = vmul.f32 %v1600, %v1676
        %vm1678 = vcmp.eq.f32.partialorder %v1600, inf
        %v1679 = vsel %vm1678, %v1600, %v1677
        %vm1680 = vcmp.eq.f32.partialorder %v1600, 0.0
        %v1681 = vand.u32 %v1600, 2147483648
        %v1682 = vsel %vm1680, %v1681, %v1679
        %v1683 = vrsqrt.pop %v1602
        %v1684 = vmul.f32 %v1602, %v1683
        %vm1685 = vcmp.eq.f32.partialorder %v1602, inf
        %v1686 = vsel %vm1685, %v1602, %v1684
        %vm1687 = vcmp.eq.f32.partialorder %v1602, 0.0
        %v1688 = vand.u32 %v1602, 2147483648
        %v1689 = vsel %vm1687, %v1688, %v1686
        %v1690 = vrsqrt.pop %v1604
        %v1691 = vmul.f32 %v1604, %v1690
        %vm1692 = vcmp.eq.f32.partialorder %v1604, inf
        %v1693 = vsel %vm1692, %v1604, %v1691
        %vm1694 = vcmp.eq.f32.partialorder %v1604, 0.0
        %v1695 = vand.u32 %v1604, 2147483648
        %v1696 = vsel %vm1694, %v1695, %v1693
        %v1697 = vrsqrt.pop %v1606
        %v1698 = vmul.f32 %v1606, %v1697
        %vm1699 = vcmp.eq.f32.partialorder %v1606, inf
        %v1700 = vsel %vm1699, %v1606, %v1698
        %vm1701 = vcmp.eq.f32.partialorder %v1606, 0.0
        %v1702 = vand.u32 %v1606, 2147483648
        %v1703 = vsel %vm1701, %v1702, %v1700
        %v1704 = vrsqrt.pop %v1608
        %v1705 = vmul.f32 %v1608, %v1704
        %vm1706 = vcmp.eq.f32.partialorder %v1608, inf
        %v1707 = vsel %vm1706, %v1608, %v1705
        %vm1708 = vcmp.eq.f32.partialorder %v1608, 0.0
        %v1709 = vand.u32 %v1608, 2147483648
        %v1710 = vsel %vm1708, %v1709, %v1707
        %v1711 = vrsqrt.pop %v1610
        %v1712 = vmul.f32 %v1610, %v1711
        %vm1713 = vcmp.eq.f32.partialorder %v1610, inf
        %v1714 = vsel %vm1713, %v1610, %v1712
        %vm1715 = vcmp.eq.f32.partialorder %v1610, 0.0
        %v1716 = vand.u32 %v1610, 2147483648
        %v1717 = vsel %vm1715, %v1716, %v1714
        %v1718 = vrsqrt.pop %v1612
        %v1719 = vmul.f32 %v1612, %v1718
        %vm1720 = vcmp.eq.f32.partialorder %v1612, inf
        %v1721 = vsel %vm1720, %v1612, %v1719
        %vm1722 = vcmp.eq.f32.partialorder %v1612, 0.0
        %v1723 = vand.u32 %v1612, 2147483648
        %v1724 = vsel %vm1722, %v1723, %v1721
        %v1725 = vmul.f32 %v1619, 0.088388346
        %v1726 = vmul.f32 %v1626, 0.088388346
        %v1727 = vmul.f32 %v1633, 0.088388346
        %v1728 = vmul.f32 %v1640, 0.088388346
        %v1729 = vmul.f32 %v1647, 0.088388346
        %v1730 = vmul.f32 %v1654, 0.088388346
        %v1731 = vmul.f32 %v1661, 0.088388346
        %v1732 = vmul.f32 %v1668, 0.088388346
        %v1733 = vmul.f32 %v1675, 0.088388346
        %v1734 = vmul.f32 %v1682, 0.088388346
        %v1735 = vmul.f32 %v1689, 0.088388346
        %v1736 = vmul.f32 %v1696, 0.088388346
        %v1737 = vmul.f32 %v1703, 0.088388346
        %v1738 = vmul.f32 %v1710, 0.088388346
        %v1739 = vmul.f32 %v1717, 0.088388346
        %v1740 = vmul.f32 %v1724, 0.088388346
        %v1741 = vmul.f32 %v1725, %v1481
        %v1742 = vmul.f32 %v1726, %v1483
        %v1743 = vmul.f32 %v1727, %v1485
        %v1744 = vmul.f32 %v1728, %v1487
        %v1745 = vmul.f32 %v1729, %v1489
        %v1746 = vmul.f32 %v1730, %v1491
        %v1747 = vmul.f32 %v1731, %v1493
        %v1748 = vmul.f32 %v1732, %v1495
        %v1749 = vmul.f32 %v1733, %v1497
        %v1750 = vmul.f32 %v1734, %v1499
        %v1751 = vmul.f32 %v1735, %v1501
        %v1752 = vmul.f32 %v1736, %v1503
        %v1753 = vmul.f32 %v1737, %v1505
        %v1754 = vmul.f32 %v1738, %v1507
        %v1755 = vmul.f32 %v1739, %v1509
        %v1756 = vmul.f32 %v1740, %v1511
        %1757 = vxpose.xlu0.b32.start [1/16] %v1741, 128
        %1758 = vxpose.xlu0.b32.cont [2/16] %v1742, 128
        %1759 = vxpose.xlu0.b32.cont [3/16] %v1743, 128
        %1760 = vxpose.xlu0.b32.cont [4/16] %v1744, 128
        %1761 = vxpose.xlu0.b32.cont [5/16] %v1745, 128
        %1762 = vxpose.xlu0.b32.cont [6/16] %v1746, 128
        %1763 = vxpose.xlu0.b32.cont [7/16] %v1747, 128
        %1764 = vxpose.xlu0.b32.cont [8/16] %v1748, 128
        %1765 = vxpose.xlu0.b32.cont [9/16] %v1749, 128
        %1766 = vxpose.xlu0.b32.cont [10/16] %v1750, 128
        %1767 = vxpose.xlu0.b32.cont [11/16] %v1751, 128
        %1768 = vxpose.xlu0.b32.cont [12/16] %v1752, 128
        %1769 = vxpose.xlu0.b32.cont [13/16] %v1753, 128
        %1770 = vxpose.xlu0.b32.cont [14/16] %v1754, 128
        %1771 = vxpose.xlu0.b32.cont [15/16] %v1755, 128
        %1772 = vxpose.xlu0.b32.end [16/16] %v1756, 128
        %v1773 = vpop.trf.xlu0
        %v1774 = vpop.trf.xlu0
        %v1775 = vpop.trf.xlu0
        %v1776 = vpop.trf.xlu0
        %v1777 = vpop.trf.xlu0
        %v1778 = vpop.trf.xlu0
        %v1779 = vpop.trf.xlu0
        %v1780 = vpop.trf.xlu0
        %v1781 = vpop.trf.xlu0
        %v1782 = vpop.trf.xlu0
        %v1783 = vpop.trf.xlu0
        %v1784 = vpop.trf.xlu0
        %v1785 = vpop.trf.xlu0
        %v1786 = vpop.trf.xlu0
        %v1787 = vpop.trf.xlu0
        %v1788 = vpop.trf.xlu0
        %v1789 = vand.u32 %v1431, 65535
        %v1790 = vshra.s32 %v1431, 16
        %v1791 = vcvt.s32.f32 %v1789
        %v1792 = vcvt.s32.f32 %v1790
        %1793 = vmin.xlane.f32.xlu0 %v1792
        %v1794 = vpop.xlane.xlu0 %1793
        %vm1795 = vcmp.eq.f32.partialorder %v1792, %v1794
        %v1796 = vsel %vm1795, %v1791, inf
        %1797 = vmin.xlane.f32.xlu0 %v1796
        %v1798 = vpop.xlane.xlu0 %1797
        %v1799 = vcvt.f32.s32 %v1798
        %v1800 = vcvt.f32.s32 %v1794
        %v1801 = vshll.u32 %v1800, 16
        %v1802 = vadd.s32 %v1801, %v1799
        %v1803 = vand.u32 %v1432, 65535
        %v1804 = vshra.s32 %v1432, 16
        %v1805 = vcvt.s32.f32 %v1803
        %v1806 = vcvt.s32.f32 %v1804
        %1807 = vmin.xlane.f32.xlu0 %v1806
        %v1808 = vpop.xlane.xlu0 %1807
        %vm1809 = vcmp.eq.f32.partialorder %v1806, %v1808
        %v1810 = vsel %vm1809, %v1805, inf
        %1811 = vmin.xlane.f32.xlu0 %v1810
        %v1812 = vpop.xlane.xlu0 %1811
        %v1813 = vcvt.f32.s32 %v1812
        %v1814 = vcvt.f32.s32 %v1808
        %v1815 = vshll.u32 %v1814, 16
        %v1816 = vadd.s32 %v1815, %v1813
        %v1817 = vand.u32 %v1433, 65535
        %v1818 = vshra.s32 %v1433, 16
        %v1819 = vcvt.s32.f32 %v1817
        %v1820 = vcvt.s32.f32 %v1818
        %1821 = vmin.xlane.f32.xlu0 %v1820
        %v1822 = vpop.xlane.xlu0 %1821
        %vm1823 = vcmp.eq.f32.partialorder %v1820, %v1822
        %v1824 = vsel %vm1823, %v1819, inf
        %1825 = vmin.xlane.f32.xlu0 %v1824
        %v1826 = vpop.xlane.xlu0 %1825
        %v1827 = vcvt.f32.s32 %v1826
        %v1828 = vcvt.f32.s32 %v1822
        %v1829 = vshll.u32 %v1828, 16
        %v1830 = vadd.s32 %v1829, %v1827
        %v1831 = vand.u32 %v1434, 65535
        %v1832 = vshra.s32 %v1434, 16
        %v1833 = vcvt.s32.f32 %v1831
        %v1834 = vcvt.s32.f32 %v1832
        %1835 = vmin.xlane.f32.xlu0 %v1834
        %v1836 = vpop.xlane.xlu0 %1835
        %vm1837 = vcmp.eq.f32.partialorder %v1834, %v1836
        %v1838 = vsel %vm1837, %v1833, inf
        %1839 = vmin.xlane.f32.xlu0 %v1838
        %v1840 = vpop.xlane.xlu0 %1839
        %v1841 = vcvt.f32.s32 %v1840
        %v1842 = vcvt.f32.s32 %v1836
        %v1843 = vshll.u32 %v1842, 16
        %v1844 = vadd.s32 %v1843, %v1841
        %v1845 = vand.u32 %v1435, 65535
        %v1846 = vshra.s32 %v1435, 16
        %v1847 = vcvt.s32.f32 %v1845
        %v1848 = vcvt.s32.f32 %v1846
        %1849 = vmin.xlane.f32.xlu0 %v1848
        %v1850 = vpop.xlane.xlu0 %1849
        %vm1851 = vcmp.eq.f32.partialorder %v1848, %v1850
        %v1852 = vsel %vm1851, %v1847, inf
        %1853 = vmin.xlane.f32.xlu0 %v1852
        %v1854 = vpop.xlane.xlu0 %1853
        %v1855 = vcvt.f32.s32 %v1854
        %v1856 = vcvt.f32.s32 %v1850
        %v1857 = vshll.u32 %v1856, 16
        %v1858 = vadd.s32 %v1857, %v1855
        %v1859 = vand.u32 %v1436, 65535
        %v1860 = vshra.s32 %v1436, 16
        %v1861 = vcvt.s32.f32 %v1859
        %v1862 = vcvt.s32.f32 %v1860
        %1863 = vmin.xlane.f32.xlu0 %v1862
        %v1864 = vpop.xlane.xlu0 %1863
        %vm1865 = vcmp.eq.f32.partialorder %v1862, %v1864
        %v1866 = vsel %vm1865, %v1861, inf
        %1867 = vmin.xlane.f32.xlu0 %v1866
        %v1868 = vpop.xlane.xlu0 %1867
        %v1869 = vcvt.f32.s32 %v1868
        %v1870 = vcvt.f32.s32 %v1864
        %v1871 = vshll.u32 %v1870, 16
        %v1872 = vadd.s32 %v1871, %v1869
        %v1873 = vand.u32 %v1437, 65535
        %v1874 = vshra.s32 %v1437, 16
        %v1875 = vcvt.s32.f32 %v1873
        %v1876 = vcvt.s32.f32 %v1874
        %1877 = vmin.xlane.f32.xlu0 %v1876
        %v1878 = vpop.xlane.xlu0 %1877
        %vm1879 = vcmp.eq.f32.partialorder %v1876, %v1878
        %v1880 = vsel %vm1879, %v1875, inf
        %1881 = vmin.xlane.f32.xlu0 %v1880
        %v1882 = vpop.xlane.xlu0 %1881
        %v1883 = vcvt.f32.s32 %v1882
        %v1884 = vcvt.f32.s32 %v1878
        %v1885 = vshll.u32 %v1884, 16
        %v1886 = vadd.s32 %v1885, %v1883
        %v1887 = vand.u32 %v1438, 65535
        %v1888 = vshra.s32 %v1438, 16
        %v1889 = vcvt.s32.f32 %v1887
        %v1890 = vcvt.s32.f32 %v1888
        %1891 = vmin.xlane.f32.xlu0 %v1890
        %v1892 = vpop.xlane.xlu0 %1891
        %vm1893 = vcmp.eq.f32.partialorder %v1890, %v1892
        %v1894 = vsel %vm1893, %v1889, inf
        %1895 = vmin.xlane.f32.xlu0 %v1894
        %v1896 = vpop.xlane.xlu0 %1895
        %v1897 = vcvt.f32.s32 %v1896
        %v1898 = vcvt.f32.s32 %v1892
        %v1899 = vshll.u32 %v1898, 16
        %v1900 = vadd.s32 %v1899, %v1897
        %v1901 = vand.u32 %v1439, 65535
        %v1902 = vshra.s32 %v1439, 16
        %v1903 = vcvt.s32.f32 %v1901
        %v1904 = vcvt.s32.f32 %v1902
        %1905 = vmin.xlane.f32.xlu0 %v1904
        %v1906 = vpop.xlane.xlu0 %1905
        %vm1907 = vcmp.eq.f32.partialorder %v1904, %v1906
        %v1908 = vsel %vm1907, %v1903, inf
        %1909 = vmin.xlane.f32.xlu0 %v1908
        %v1910 = vpop.xlane.xlu0 %1909
        %v1911 = vcvt.f32.s32 %v1910
        %v1912 = vcvt.f32.s32 %v1906
        %v1913 = vshll.u32 %v1912, 16
        %v1914 = vadd.s32 %v1913, %v1911
        %v1915 = vand.u32 %v1440, 65535
        %v1916 = vshra.s32 %v1440, 16
        %v1917 = vcvt.s32.f32 %v1915
        %v1918 = vcvt.s32.f32 %v1916
        %1919 = vmin.xlane.f32.xlu0 %v1918
        %v1920 = vpop.xlane.xlu0 %1919
        %vm1921 = vcmp.eq.f32.partialorder %v1918, %v1920
        %v1922 = vsel %vm1921, %v1917, inf
        %1923 = vmin.xlane.f32.xlu0 %v1922
        %v1924 = vpop.xlane.xlu0 %1923
        %v1925 = vcvt.f32.s32 %v1924
        %v1926 = vcvt.f32.s32 %v1920
        %v1927 = vshll.u32 %v1926, 16
        %v1928 = vadd.s32 %v1927, %v1925
        %v1929 = vand.u32 %v1441, 65535
        %v1930 = vshra.s32 %v1441, 16
        %v1931 = vcvt.s32.f32 %v1929
        %v1932 = vcvt.s32.f32 %v1930
        %1933 = vmin.xlane.f32.xlu0 %v1932
        %v1934 = vpop.xlane.xlu0 %1933
        %vm1935 = vcmp.eq.f32.partialorder %v1932, %v1934
        %v1936 = vsel %vm1935, %v1931, inf
        %1937 = vmin.xlane.f32.xlu0 %v1936
        %v1938 = vpop.xlane.xlu0 %1937
        %v1939 = vcvt.f32.s32 %v1938
        %v1940 = vcvt.f32.s32 %v1934
        %v1941 = vshll.u32 %v1940, 16
        %v1942 = vadd.s32 %v1941, %v1939
        %v1943 = vand.u32 %v1442, 65535
        %v1944 = vshra.s32 %v1442, 16
        %v1945 = vcvt.s32.f32 %v1943
        %v1946 = vcvt.s32.f32 %v1944
        %1947 = vmin.xlane.f32.xlu0 %v1946
        %v1948 = vpop.xlane.xlu0 %1947
        %vm1949 = vcmp.eq.f32.partialorder %v1946, %v1948
        %v1950 = vsel %vm1949, %v1945, inf
        %1951 = vmin.xlane.f32.xlu0 %v1950
        %v1952 = vpop.xlane.xlu0 %1951
        %v1953 = vcvt.f32.s32 %v1952
        %v1954 = vcvt.f32.s32 %v1948
        %v1955 = vshll.u32 %v1954, 16
        %v1956 = vadd.s32 %v1955, %v1953
        %v1957 = vand.u32 %v1443, 65535
        %v1958 = vshra.s32 %v1443, 16
        %v1959 = vcvt.s32.f32 %v1957
        %v1960 = vcvt.s32.f32 %v1958
        %1961 = vmin.xlane.f32.xlu0 %v1960
        %v1962 = vpop.xlane.xlu0 %1961
        %vm1963 = vcmp.eq.f32.partialorder %v1960, %v1962
        %v1964 = vsel %vm1963, %v1959, inf
        %1965 = vmin.xlane.f32.xlu0 %v1964
        %v1966 = vpop.xlane.xlu0 %1965
        %v1967 = vcvt.f32.s32 %v1966
        %v1968 = vcvt.f32.s32 %v1962
        %v1969 = vshll.u32 %v1968, 16
        %v1970 = vadd.s32 %v1969, %v1967
        %v1971 = vand.u32 %v1444, 65535
        %v1972 = vshra.s32 %v1444, 16
        %v1973 = vcvt.s32.f32 %v1971
        %v1974 = vcvt.s32.f32 %v1972
        %1975 = vmin.xlane.f32.xlu0 %v1974
        %v1976 = vpop.xlane.xlu0 %1975
        %vm1977 = vcmp.eq.f32.partialorder %v1974, %v1976
        %v1978 = vsel %vm1977, %v1973, inf
        %1979 = vmin.xlane.f32.xlu0 %v1978
        %v1980 = vpop.xlane.xlu0 %1979
        %v1981 = vcvt.f32.s32 %v1980
        %v1982 = vcvt.f32.s32 %v1976
        %v1983 = vshll.u32 %v1982, 16
        %v1984 = vadd.s32 %v1983, %v1981
        %v1985 = vand.u32 %v1445, 65535
        %v1986 = vshra.s32 %v1445, 16
        %v1987 = vcvt.s32.f32 %v1985
        %v1988 = vcvt.s32.f32 %v1986
        %1989 = vmin.xlane.f32.xlu0 %v1988
        %v1990 = vpop.xlane.xlu0 %1989
        %vm1991 = vcmp.eq.f32.partialorder %v1988, %v1990
        %v1992 = vsel %vm1991, %v1987, inf
        %1993 = vmin.xlane.f32.xlu0 %v1992
        %v1994 = vpop.xlane.xlu0 %1993
        %v1995 = vcvt.f32.s32 %v1994
        %v1996 = vcvt.f32.s32 %v1990
        %v1997 = vshll.u32 %v1996, 16
        %v1998 = vadd.s32 %v1997, %v1995
        %v1999 = vand.u32 %v1446, 65535
        %v2000 = vshra.s32 %v1446, 16
        %v2001 = vcvt.s32.f32 %v1999
        %v2002 = vcvt.s32.f32 %v2000
        %2003 = vmin.xlane.f32.xlu0 %v2002
        %v2004 = vpop.xlane.xlu0 %2003
        %vm2005 = vcmp.eq.f32.partialorder %v2002, %v2004
        %v2006 = vsel %vm2005, %v2001, inf
        %2007 = vmin.xlane.f32.xlu0 %v2006
        %v2008 = vpop.xlane.xlu0 %2007
        %v2009 = vcvt.f32.s32 %v2008
        %v2010 = vcvt.f32.s32 %v2004
        %v2011 = vshll.u32 %v2010, 16
        %v2012 = vadd.s32 %v2011, %v2009
        %v2013 = vand.u32 %v1802, 4294967168
        %v2014 = vand.u32 %v1816, 4294967168
        %v2015 = vand.u32 %v1830, 4294967168
        %v2016 = vand.u32 %v1844, 4294967168
        %v2017 = vand.u32 %v1858, 4294967168
        %v2018 = vand.u32 %v1872, 4294967168
        %v2019 = vand.u32 %v1886, 4294967168
        %v2020 = vand.u32 %v1900, 4294967168
        %v2021 = vand.u32 %v1914, 4294967168
        %v2022 = vand.u32 %v1928, 4294967168
        %v2023 = vand.u32 %v1942, 4294967168
        %v2024 = vand.u32 %v1956, 4294967168
        %v2025 = vand.u32 %v1970, 4294967168
        %v2026 = vand.u32 %v1984, 4294967168
        %v2027 = vand.u32 %v1998, 4294967168
        %v2028 = vand.u32 %v2012, 4294967168
        %v2045 = vadd.f32 %v1399, %v2013
        %v2046 = vadd.f32 %v1400, %v2014
        %v2047 = vadd.f32 %v1401, %v2015
        %v2048 = vadd.f32 %v1402, %v2016
        %v2049 = vadd.f32 %v1403, %v2017
        %v2050 = vadd.f32 %v1404, %v2018
        %v2051 = vadd.f32 %v1405, %v2019
        %v2052 = vadd.f32 %v1406, %v2020
        %v2053 = vadd.f32 %v1407, %v2021
        %v2054 = vadd.f32 %v1408, %v2022
        %v2055 = vadd.f32 %v1409, %v2023
        %v2056 = vadd.f32 %v1410, %v2024
        %v2057 = vadd.f32 %v1411, %v2025
        %v2058 = vadd.f32 %v1412, %v2026
        %v2059 = vadd.f32 %v1413, %v2027
        %v2060 = vadd.f32 %v1414, %v2028
        %vm2061 = vcmp.eq.s32.totalorder %v1431, %v1802
        %vm2062 = vcmp.eq.s32.totalorder %v1432, %v1816
        %vm2063 = vcmp.eq.s32.totalorder %v1433, %v1830
        %vm2064 = vcmp.eq.s32.totalorder %v1434, %v1844
        %vm2065 = vcmp.eq.s32.totalorder %v1435, %v1858
        %vm2066 = vcmp.eq.s32.totalorder %v1436, %v1872
        %vm2067 = vcmp.eq.s32.totalorder %v1437, %v1886
        %vm2068 = vcmp.eq.s32.totalorder %v1438, %v1900
        %vm2069 = vcmp.eq.s32.totalorder %v1439, %v1914
        %vm2070 = vcmp.eq.s32.totalorder %v1440, %v1928
        %vm2071 = vcmp.eq.s32.totalorder %v1441, %v1942
        %vm2072 = vcmp.eq.s32.totalorder %v1442, %v1956
        %vm2073 = vcmp.eq.s32.totalorder %v1443, %v1970
        %vm2074 = vcmp.eq.s32.totalorder %v1444, %v1984
        %vm2075 = vcmp.eq.s32.totalorder %v1445, %v1998
        %vm2076 = vcmp.eq.s32.totalorder %v1446, %v2012
        %v2077 = vsel %vm2061, 2147483647, %v1431
        %v2078 = vsel %vm2062, 2147483647, %v1432
        %v2079 = vsel %vm2063, 2147483647, %v1433
        %v2080 = vsel %vm2064, 2147483647, %v1434
        %v2081 = vsel %vm2065, 2147483647, %v1435
        %v2082 = vsel %vm2066, 2147483647, %v1436
        %v2083 = vsel %vm2067, 2147483647, %v1437
        %v2084 = vsel %vm2068, 2147483647, %v1438
        %v2085 = vsel %vm2069, 2147483647, %v1439
        %v2086 = vsel %vm2070, 2147483647, %v1440
        %v2087 = vsel %vm2071, 2147483647, %v1441
        %v2088 = vsel %vm2072, 2147483647, %v1442
        %v2089 = vsel %vm2073, 2147483647, %v1443
        %v2090 = vsel %vm2074, 2147483647, %v1444
        %v2091 = vsel %vm2075, 2147483647, %v1445
        %v2092 = vsel %vm2076, 2147483647, %v1446
        %v2093 = vand.u32 %v2077, 65535
        %v2094 = vshra.s32 %v2077, 16
        %v2095 = vcvt.s32.f32 %v2093
        %v2096 = vcvt.s32.f32 %v2094
        %2097 = vmin.xlane.f32.xlu0 %v2096
        %v2098 = vpop.xlane.xlu0 %2097
        %vm2099 = vcmp.eq.f32.partialorder %v2096, %v2098
        %v2100 = vsel %vm2099, %v2095, inf
        %2101 = vmin.xlane.f32.xlu0 %v2100
        %v2102 = vpop.xlane.xlu0 %2101
        %v2103 = vcvt.f32.s32 %v2102
        %v2104 = vcvt.f32.s32 %v2098
        %v2105 = vshll.u32 %v2104, 16
        %v2106 = vadd.s32 %v2105, %v2103
        %v2107 = vand.u32 %v2078, 65535
        %v2108 = vshra.s32 %v2078, 16
        %v2109 = vcvt.s32.f32 %v2107
        %v2110 = vcvt.s32.f32 %v2108
        %2111 = vmin.xlane.f32.xlu0 %v2110
        %v2112 = vpop.xlane.xlu0 %2111
        %vm2113 = vcmp.eq.f32.partialorder %v2110, %v2112
        %v2114 = vsel %vm2113, %v2109, inf
        %2115 = vmin.xlane.f32.xlu0 %v2114
        %v2116 = vpop.xlane.xlu0 %2115
        %v2117 = vcvt.f32.s32 %v2116
        %v2118 = vcvt.f32.s32 %v2112
        %v2119 = vshll.u32 %v2118, 16
        %v2120 = vadd.s32 %v2119, %v2117
        %v2121 = vand.u32 %v2079, 65535
        %v2122 = vshra.s32 %v2079, 16
        %v2123 = vcvt.s32.f32 %v2121
        %v2124 = vcvt.s32.f32 %v2122
        %2125 = vmin.xlane.f32.xlu0 %v2124
        %v2126 = vpop.xlane.xlu0 %2125
        %vm2127 = vcmp.eq.f32.partialorder %v2124, %v2126
        %v2128 = vsel %vm2127, %v2123, inf
        %2129 = vmin.xlane.f32.xlu0 %v2128
        %v2130 = vpop.xlane.xlu0 %2129
        %v2131 = vcvt.f32.s32 %v2130
        %v2132 = vcvt.f32.s32 %v2126
        %v2133 = vshll.u32 %v2132, 16
        %v2134 = vadd.s32 %v2133, %v2131
        %v2135 = vand.u32 %v2080, 65535
        %v2136 = vshra.s32 %v2080, 16
        %v2137 = vcvt.s32.f32 %v2135
        %v2138 = vcvt.s32.f32 %v2136
        %2139 = vmin.xlane.f32.xlu0 %v2138
        %v2140 = vpop.xlane.xlu0 %2139
        %vm2141 = vcmp.eq.f32.partialorder %v2138, %v2140
        %v2142 = vsel %vm2141, %v2137, inf
        %2143 = vmin.xlane.f32.xlu0 %v2142
        %v2144 = vpop.xlane.xlu0 %2143
        %v2145 = vcvt.f32.s32 %v2144
        %v2146 = vcvt.f32.s32 %v2140
        %v2147 = vshll.u32 %v2146, 16
        %v2148 = vadd.s32 %v2147, %v2145
        %v2149 = vand.u32 %v2081, 65535
        %v2150 = vshra.s32 %v2081, 16
        %v2151 = vcvt.s32.f32 %v2149
        %v2152 = vcvt.s32.f32 %v2150
        %2153 = vmin.xlane.f32.xlu0 %v2152
        %v2154 = vpop.xlane.xlu0 %2153
        %vm2155 = vcmp.eq.f32.partialorder %v2152, %v2154
        %v2156 = vsel %vm2155, %v2151, inf
        %2157 = vmin.xlane.f32.xlu0 %v2156
        %v2158 = vpop.xlane.xlu0 %2157
        %v2159 = vcvt.f32.s32 %v2158
        %v2160 = vcvt.f32.s32 %v2154
        %v2161 = vshll.u32 %v2160, 16
        %v2162 = vadd.s32 %v2161, %v2159
        %v2163 = vand.u32 %v2082, 65535
        %v2164 = vshra.s32 %v2082, 16
        %v2165 = vcvt.s32.f32 %v2163
        %v2166 = vcvt.s32.f32 %v2164
        %2167 = vmin.xlane.f32.xlu0 %v2166
        %v2168 = vpop.xlane.xlu0 %2167
        %vm2169 = vcmp.eq.f32.partialorder %v2166, %v2168
        %v2170 = vsel %vm2169, %v2165, inf
        %2171 = vmin.xlane.f32.xlu0 %v2170
        %v2172 = vpop.xlane.xlu0 %2171
        %v2173 = vcvt.f32.s32 %v2172
        %v2174 = vcvt.f32.s32 %v2168
        %v2175 = vshll.u32 %v2174, 16
        %v2176 = vadd.s32 %v2175, %v2173
        %v2177 = vand.u32 %v2083, 65535
        %v2178 = vshra.s32 %v2083, 16
        %v2179 = vcvt.s32.f32 %v2177
        %v2180 = vcvt.s32.f32 %v2178
        %2181 = vmin.xlane.f32.xlu0 %v2180
        %v2182 = vpop.xlane.xlu0 %2181
        %vm2183 = vcmp.eq.f32.partialorder %v2180, %v2182
        %v2184 = vsel %vm2183, %v2179, inf
        %2185 = vmin.xlane.f32.xlu0 %v2184
        %v2186 = vpop.xlane.xlu0 %2185
        %v2187 = vcvt.f32.s32 %v2186
        %v2188 = vcvt.f32.s32 %v2182
        %v2189 = vshll.u32 %v2188, 16
        %v2190 = vadd.s32 %v2189, %v2187
        %v2191 = vand.u32 %v2084, 65535
        %v2192 = vshra.s32 %v2084, 16
        %v2193 = vcvt.s32.f32 %v2191
        %v2194 = vcvt.s32.f32 %v2192
        %2195 = vmin.xlane.f32.xlu0 %v2194
        %v2196 = vpop.xlane.xlu0 %2195
        %vm2197 = vcmp.eq.f32.partialorder %v2194, %v2196
        %v2198 = vsel %vm2197, %v2193, inf
        %2199 = vmin.xlane.f32.xlu0 %v2198
        %v2200 = vpop.xlane.xlu0 %2199
        %v2201 = vcvt.f32.s32 %v2200
        %v2202 = vcvt.f32.s32 %v2196
        %v2203 = vshll.u32 %v2202, 16
        %v2204 = vadd.s32 %v2203, %v2201
        %v2205 = vand.u32 %v2085, 65535
        %v2206 = vshra.s32 %v2085, 16
        %v2207 = vcvt.s32.f32 %v2205
        %v2208 = vcvt.s32.f32 %v2206
        %2209 = vmin.xlane.f32.xlu0 %v2208
        %v2210 = vpop.xlane.xlu0 %2209
        %vm2211 = vcmp.eq.f32.partialorder %v2208, %v2210
        %v2212 = vsel %vm2211, %v2207, inf
        %2213 = vmin.xlane.f32.xlu0 %v2212
        %v2214 = vpop.xlane.xlu0 %2213
        %v2215 = vcvt.f32.s32 %v2214
        %v2216 = vcvt.f32.s32 %v2210
        %v2217 = vshll.u32 %v2216, 16
        %v2218 = vadd.s32 %v2217, %v2215
        %v2219 = vand.u32 %v2086, 65535
        %v2220 = vshra.s32 %v2086, 16
        %v2221 = vcvt.s32.f32 %v2219
        %v2222 = vcvt.s32.f32 %v2220
        %2223 = vmin.xlane.f32.xlu0 %v2222
        %v2224 = vpop.xlane.xlu0 %2223
        %vm2225 = vcmp.eq.f32.partialorder %v2222, %v2224
        %v2226 = vsel %vm2225, %v2221, inf
        %2227 = vmin.xlane.f32.xlu0 %v2226
        %v2228 = vpop.xlane.xlu0 %2227
        %v2229 = vcvt.f32.s32 %v2228
        %v2230 = vcvt.f32.s32 %v2224
        %v2231 = vshll.u32 %v2230, 16
        %v2232 = vadd.s32 %v2231, %v2229
        %v2233 = vand.u32 %v2087, 65535
        %v2234 = vshra.s32 %v2087, 16
        %v2235 = vcvt.s32.f32 %v2233
        %v2236 = vcvt.s32.f32 %v2234
        %2237 = vmin.xlane.f32.xlu0 %v2236
        %v2238 = vpop.xlane.xlu0 %2237
        %vm2239 = vcmp.eq.f32.partialorder %v2236, %v2238
        %v2240 = vsel %vm2239, %v2235, inf
        %2241 = vmin.xlane.f32.xlu0 %v2240
        %v2242 = vpop.xlane.xlu0 %2241
        %v2243 = vcvt.f32.s32 %v2242
        %v2244 = vcvt.f32.s32 %v2238
        %v2245 = vshll.u32 %v2244, 16
        %v2246 = vadd.s32 %v2245, %v2243
        %v2247 = vand.u32 %v2088, 65535
        %v2248 = vshra.s32 %v2088, 16
        %v2249 = vcvt.s32.f32 %v2247
        %v2250 = vcvt.s32.f32 %v2248
        %2251 = vmin.xlane.f32.xlu0 %v2250
        %v2252 = vpop.xlane.xlu0 %2251
        %vm2253 = vcmp.eq.f32.partialorder %v2250, %v2252
        %v2254 = vsel %vm2253, %v2249, inf
        %2255 = vmin.xlane.f32.xlu0 %v2254
        %v2256 = vpop.xlane.xlu0 %2255
        %v2257 = vcvt.f32.s32 %v2256
        %v2258 = vcvt.f32.s32 %v2252
        %v2259 = vshll.u32 %v2258, 16
        %v2260 = vadd.s32 %v2259, %v2257
        %v2261 = vand.u32 %v2089, 65535
        %v2262 = vshra.s32 %v2089, 16
        %v2263 = vcvt.s32.f32 %v2261
        %v2264 = vcvt.s32.f32 %v2262
        %2265 = vmin.xlane.f32.xlu0 %v2264
        %v2266 = vpop.xlane.xlu0 %2265
        %vm2267 = vcmp.eq.f32.partialorder %v2264, %v2266
        %v2268 = vsel %vm2267, %v2263, inf
        %2269 = vmin.xlane.f32.xlu0 %v2268
        %v2270 = vpop.xlane.xlu0 %2269
        %v2271 = vcvt.f32.s32 %v2270
        %v2272 = vcvt.f32.s32 %v2266
        %v2273 = vshll.u32 %v2272, 16
        %v2274 = vadd.s32 %v2273, %v2271
        %v2275 = vand.u32 %v2090, 65535
        %v2276 = vshra.s32 %v2090, 16
        %v2277 = vcvt.s32.f32 %v2275
        %v2278 = vcvt.s32.f32 %v2276
        %2279 = vmin.xlane.f32.xlu0 %v2278
        %v2280 = vpop.xlane.xlu0 %2279
        %vm2281 = vcmp.eq.f32.partialorder %v2278, %v2280
        %v2282 = vsel %vm2281, %v2277, inf
        %2283 = vmin.xlane.f32.xlu0 %v2282
        %v2284 = vpop.xlane.xlu0 %2283
        %v2285 = vcvt.f32.s32 %v2284
        %v2286 = vcvt.f32.s32 %v2280
        %v2287 = vshll.u32 %v2286, 16
        %v2288 = vadd.s32 %v2287, %v2285
        %v2289 = vand.u32 %v2091, 65535
        %v2290 = vshra.s32 %v2091, 16
        %v2291 = vcvt.s32.f32 %v2289
        %v2292 = vcvt.s32.f32 %v2290
        %2293 = vmin.xlane.f32.xlu0 %v2292
        %v2294 = vpop.xlane.xlu0 %2293
        %vm2295 = vcmp.eq.f32.partialorder %v2292, %v2294
        %v2296 = vsel %vm2295, %v2291, inf
        %2297 = vmin.xlane.f32.xlu0 %v2296
        %v2298 = vpop.xlane.xlu0 %2297
        %v2299 = vcvt.f32.s32 %v2298
        %v2300 = vcvt.f32.s32 %v2294
        %v2301 = vshll.u32 %v2300, 16
        %v2302 = vadd.s32 %v2301, %v2299
        %v2303 = vand.u32 %v2092, 65535
        %v2304 = vshra.s32 %v2092, 16
        %v2305 = vcvt.s32.f32 %v2303
        %v2306 = vcvt.s32.f32 %v2304
        %2307 = vmin.xlane.f32.xlu0 %v2306
        %v2308 = vpop.xlane.xlu0 %2307
        %vm2309 = vcmp.eq.f32.partialorder %v2306, %v2308
        %v2310 = vsel %vm2309, %v2305, inf
        %2311 = vmin.xlane.f32.xlu0 %v2310
        %v2312 = vpop.xlane.xlu0 %2311
        %v2313 = vcvt.f32.s32 %v2312
        %v2314 = vcvt.f32.s32 %v2308
        %v2315 = vshll.u32 %v2314, 16
        %v2316 = vadd.s32 %v2315, %v2313
        %v2317 = vand.u32 %v2106, 4294967168
        %v2318 = vand.u32 %v2120, 4294967168
        %v2319 = vand.u32 %v2134, 4294967168
        %v2320 = vand.u32 %v2148, 4294967168
        %v2321 = vand.u32 %v2162, 4294967168
        %v2322 = vand.u32 %v2176, 4294967168
        %v2323 = vand.u32 %v2190, 4294967168
        %v2324 = vand.u32 %v2204, 4294967168
        %v2325 = vand.u32 %v2218, 4294967168
        %v2326 = vand.u32 %v2232, 4294967168
        %v2327 = vand.u32 %v2246, 4294967168
        %v2328 = vand.u32 %v2260, 4294967168
        %v2329 = vand.u32 %v2274, 4294967168
        %v2330 = vand.u32 %v2288, 4294967168
        %v2331 = vand.u32 %v2302, 4294967168
        %v2332 = vand.u32 %v2316, 4294967168
        %v2349 = vadd.f32 %v2045, %v2317
        %v2350 = vadd.f32 %v2046, %v2318
        %v2351 = vadd.f32 %v2047, %v2319
        %v2352 = vadd.f32 %v2048, %v2320
        %v2353 = vadd.f32 %v2049, %v2321
        %v2354 = vadd.f32 %v2050, %v2322
        %v2355 = vadd.f32 %v2051, %v2323
        %v2356 = vadd.f32 %v2052, %v2324
        %v2357 = vadd.f32 %v2053, %v2325
        %v2358 = vadd.f32 %v2054, %v2326
        %v2359 = vadd.f32 %v2055, %v2327
        %v2360 = vadd.f32 %v2056, %v2328
        %v2361 = vadd.f32 %v2057, %v2329
        %v2362 = vadd.f32 %v2058, %v2330
        %v2363 = vadd.f32 %v2059, %v2331
        %v2364 = vadd.f32 %v2060, %v2332
        %v2365 = vsub.f32 0.0, %v2349
        %v2366 = vsub.f32 0.0, %v2350
        %v2367 = vsub.f32 0.0, %v2351
        %v2368 = vsub.f32 0.0, %v2352
        %v2369 = vsub.f32 0.0, %v2353
        %v2370 = vsub.f32 0.0, %v2354
        %v2371 = vsub.f32 0.0, %v2355
        %v2372 = vsub.f32 0.0, %v2356
        %v2373 = vsub.f32 0.0, %v2357
        %v2374 = vsub.f32 0.0, %v2358
        %v2375 = vsub.f32 0.0, %v2359
        %v2376 = vsub.f32 0.0, %v2360
        %v2377 = vsub.f32 0.0, %v2361
        %v2378 = vsub.f32 0.0, %v2362
        %v2379 = vsub.f32 0.0, %v2363
        %v2380 = vsub.f32 0.0, %v2364
        %v2381 = vrcp.pop 640.0
        %v2382 = vmul.f32 %v2365, %v2381
        %v2383 = vmul.f32 %v2366, %v2381
        %v2384 = vmul.f32 %v2367, %v2381
        %v2385 = vmul.f32 %v2368, %v2381
        %v2386 = vmul.f32 %v2369, %v2381
        %v2387 = vmul.f32 %v2370, %v2381
        %v2388 = vmul.f32 %v2371, %v2381
        %v2389 = vmul.f32 %v2372, %v2381
        %v2390 = vmul.f32 %v2373, %v2381
        %v2391 = vmul.f32 %v2374, %v2381
        %v2392 = vmul.f32 %v2375, %v2381
        %v2393 = vmul.f32 %v2376, %v2381
        %v2394 = vmul.f32 %v2377, %v2381
        %v2395 = vmul.f32 %v2378, %v2381
        %v2396 = vmul.f32 %v2379, %v2381
        %v2397 = vmul.f32 %v2380, %v2381
        %v2398 = vmul.f32 %v2382, 1.442695
        %v2399 = vpow.pop %v2398
        %v2400 = vmul.f32 %v2383, 1.442695
        %v2401 = vpow.pop %v2400
        %v2402 = vmul.f32 %v2384, 1.442695
        %v2403 = vpow.pop %v2402
        %v2404 = vmul.f32 %v2385, 1.442695
        %v2405 = vpow.pop %v2404
        %v2406 = vmul.f32 %v2386, 1.442695
        %v2407 = vpow.pop %v2406
        %v2408 = vmul.f32 %v2387, 1.442695
        %v2409 = vpow.pop %v2408
        %v2410 = vmul.f32 %v2388, 1.442695
        %v2411 = vpow.pop %v2410
        %v2412 = vmul.f32 %v2389, 1.442695
        %v2413 = vpow.pop %v2412
        %v2414 = vmul.f32 %v2390, 1.442695
        %v2415 = vpow.pop %v2414
        %v2416 = vmul.f32 %v2391, 1.442695
        %v2417 = vpow.pop %v2416
        %v2418 = vmul.f32 %v2392, 1.442695
        %v2419 = vpow.pop %v2418
        %v2420 = vmul.f32 %v2393, 1.442695
        %v2421 = vpow.pop %v2420
        %v2422 = vmul.f32 %v2394, 1.442695
        %v2423 = vpow.pop %v2422
        %v2424 = vmul.f32 %v2395, 1.442695
        %v2425 = vpow.pop %v2424
        %v2426 = vmul.f32 %v2396, 1.442695
        %v2427 = vpow.pop %v2426
        %v2428 = vmul.f32 %v2397, 1.442695
        %v2429 = vpow.pop %v2428
        %2430 = vxpose.xlu0.b32.start [1/16] %v2399, 128
        %2431 = vxpose.xlu0.b32.cont [2/16] %v2401, 128
        %2432 = vxpose.xlu0.b32.cont [3/16] %v2403, 128
        %2433 = vxpose.xlu0.b32.cont [4/16] %v2405, 128
        %2434 = vxpose.xlu0.b32.cont [5/16] %v2407, 128
        %2435 = vxpose.xlu0.b32.cont [6/16] %v2409, 128
        %2436 = vxpose.xlu0.b32.cont [7/16] %v2411, 128
        %2437 = vxpose.xlu0.b32.cont [8/16] %v2413, 128
        %2438 = vxpose.xlu0.b32.cont [9/16] %v2415, 128
        %2439 = vxpose.xlu0.b32.cont [10/16] %v2417, 128
        %2440 = vxpose.xlu0.b32.cont [11/16] %v2419, 128
        %2441 = vxpose.xlu0.b32.cont [12/16] %v2421, 128
        %2442 = vxpose.xlu0.b32.cont [13/16] %v2423, 128
        %2443 = vxpose.xlu0.b32.cont [14/16] %v2425, 128
        %2444 = vxpose.xlu0.b32.cont [15/16] %v2427, 128
        %2445 = vxpose.xlu0.b32.end [16/16] %v2429, 128
        %v2446 = vpop.trf.xlu0
        %v2447 = vpop.trf.xlu0
        %v2448 = vpop.trf.xlu0
        %v2449 = vpop.trf.xlu0
        %v2450 = vpop.trf.xlu0
        %v2451 = vpop.trf.xlu0
        %v2452 = vpop.trf.xlu0
        %v2453 = vpop.trf.xlu0
        %v2454 = vpop.trf.xlu0
        %v2455 = vpop.trf.xlu0
        %v2456 = vpop.trf.xlu0
        %v2457 = vpop.trf.xlu0
        %v2458 = vpop.trf.xlu0
        %v2459 = vpop.trf.xlu0
        %v2460 = vpop.trf.xlu0
        %v2461 = vpop.trf.xlu0
        %v2462 = vlaneseq
        %v2463 = vshrl.u32 %v2462, 7
        %v2464 = vsub.s32 0, %v2463
        %v2465 = vrot.slane %v2446, %v2464
        %vm2466 = vcmp.gt.f32.partialorder %v2465, %v2399
        %vm2467 = vcmp.gt.f32.partialorder %v2465, %v2401
        %vm2468 = vcmp.gt.f32.partialorder %v2465, %v2403
        %vm2469 = vcmp.gt.f32.partialorder %v2465, %v2405
        %vm2470 = vcmp.gt.f32.partialorder %v2465, %v2407
        %vm2471 = vcmp.gt.f32.partialorder %v2465, %v2409
        %vm2472 = vcmp.gt.f32.partialorder %v2465, %v2411
        %vm2473 = vcmp.gt.f32.partialorder %v2465, %v2413
        %vm2474 = vcmp.gt.f32.partialorder %v2465, %v2415
        %vm2475 = vcmp.gt.f32.partialorder %v2465, %v2417
        %vm2476 = vcmp.gt.f32.partialorder %v2465, %v2419
        %vm2477 = vcmp.gt.f32.partialorder %v2465, %v2421
        %vm2478 = vcmp.gt.f32.partialorder %v2465, %v2423
        %vm2479 = vcmp.gt.f32.partialorder %v2465, %v2425
        %vm2480 = vcmp.gt.f32.partialorder %v2465, %v2427
        %vm2481 = vcmp.gt.f32.partialorder %v2465, %v2429
        %v2482 = vsel %vm2466, %v445, %v1564
        %v2483 = vsel %vm2467, %v446, %v1564
        %v2484 = vsel %vm2468, %v447, %v1564
        %v2485 = vsel %vm2469, %v448, %v1564
        %v2486 = vsel %vm2470, %v449, %v1564
        %v2487 = vsel %vm2471, %v450, %v1564
        %v2488 = vsel %vm2472, %v451, %v1564
        %v2489 = vsel %vm2473, %v452, %v1564
        %v2490 = vsel %vm2474, %v453, %v1564
        %v2491 = vsel %vm2475, %v454, %v1564
        %v2492 = vsel %vm2476, %v455, %v1564
        %v2493 = vsel %vm2477, %v456, %v1564
        %v2494 = vsel %vm2478, %v457, %v1564
        %v2495 = vsel %vm2479, %v458, %v1564
        %v2496 = vsel %vm2480, %v459, %v1564
        %v2497 = vsel %vm2481, %v460, %v1564
        %2498 = vmin.xlane.f32.xlu0 %v2482
        %v2499 = vpop.xlane.xlu0 %2498
        %2500 = vmin.xlane.f32.xlu0 %v2483
        %v2501 = vpop.xlane.xlu0 %2500
        %2502 = vmin.xlane.f32.xlu0 %v2484
        %v2503 = vpop.xlane.xlu0 %2502
        %2504 = vmin.xlane.f32.xlu0 %v2485
        %v2505 = vpop.xlane.xlu0 %2504
        %2506 = vmin.xlane.f32.xlu0 %v2486
        %v2507 = vpop.xlane.xlu0 %2506
        %2508 = vmin.xlane.f32.xlu0 %v2487
        %v2509 = vpop.xlane.xlu0 %2508
        %2510 = vmin.xlane.f32.xlu0 %v2488
        %v2511 = vpop.xlane.xlu0 %2510
        %2512 = vmin.xlane.f32.xlu0 %v2489
        %v2513 = vpop.xlane.xlu0 %2512
        %2514 = vmin.xlane.f32.xlu0 %v2490
        %v2515 = vpop.xlane.xlu0 %2514
        %2516 = vmin.xlane.f32.xlu0 %v2491
        %v2517 = vpop.xlane.xlu0 %2516
        %2518 = vmin.xlane.f32.xlu0 %v2492
        %v2519 = vpop.xlane.xlu0 %2518
        %2520 = vmin.xlane.f32.xlu0 %v2493
        %v2521 = vpop.xlane.xlu0 %2520
        %2522 = vmin.xlane.f32.xlu0 %v2494
        %v2523 = vpop.xlane.xlu0 %2522
        %2524 = vmin.xlane.f32.xlu0 %v2495
        %v2525 = vpop.xlane.xlu0 %2524
        %2526 = vmin.xlane.f32.xlu0 %v2496
        %v2527 = vpop.xlane.xlu0 %2526
        %2528 = vmin.xlane.f32.xlu0 %v2497
        %v2529 = vpop.xlane.xlu0 %2528
        %v2530 = vrsqrt.pop %v2499
        %v2531 = vmul.f32 %v2499, %v2530
        %vm2532 = vcmp.eq.f32.partialorder %v2499, inf
        %v2533 = vsel %vm2532, %v2499, %v2531
        %vm2534 = vcmp.eq.f32.partialorder %v2499, 0.0
        %v2535 = vand.u32 %v2499, 2147483648
        %v2536 = vsel %vm2534, %v2535, %v2533
        %v2537 = vrsqrt.pop %v2501
        %v2538 = vmul.f32 %v2501, %v2537
        %vm2539 = vcmp.eq.f32.partialorder %v2501, inf
        %v2540 = vsel %vm2539, %v2501, %v2538
        %vm2541 = vcmp.eq.f32.partialorder %v2501, 0.0
        %v2542 = vand.u32 %v2501, 2147483648
        %v2543 = vsel %vm2541, %v2542, %v2540
        %v2544 = vrsqrt.pop %v2503
        %v2545 = vmul.f32 %v2503, %v2544
        %vm2546 = vcmp.eq.f32.partialorder %v2503, inf
        %v2547 = vsel %vm2546, %v2503, %v2545
        %vm2548 = vcmp.eq.f32.partialorder %v2503, 0.0
        %v2549 = vand.u32 %v2503, 2147483648
        %v2550 = vsel %vm2548, %v2549, %v2547
        %v2551 = vrsqrt.pop %v2505
        %v2552 = vmul.f32 %v2505, %v2551
        %vm2553 = vcmp.eq.f32.partialorder %v2505, inf
        %v2554 = vsel %vm2553, %v2505, %v2552
        %vm2555 = vcmp.eq.f32.partialorder %v2505, 0.0
        %v2556 = vand.u32 %v2505, 2147483648
        %v2557 = vsel %vm2555, %v2556, %v2554
        %v2558 = vrsqrt.pop %v2507
        %v2559 = vmul.f32 %v2507, %v2558
        %vm2560 = vcmp.eq.f32.partialorder %v2507, inf
        %v2561 = vsel %vm2560, %v2507, %v2559
        %vm2562 = vcmp.eq.f32.partialorder %v2507, 0.0
        %v2563 = vand.u32 %v2507, 2147483648
        %v2564 = vsel %vm2562, %v2563, %v2561
        %v2565 = vrsqrt.pop %v2509
        %v2566 = vmul.f32 %v2509, %v2565
        %vm2567 = vcmp.eq.f32.partialorder %v2509, inf
        %v2568 = vsel %vm2567, %v2509, %v2566
        %vm2569 = vcmp.eq.f32.partialorder %v2509, 0.0
        %v2570 = vand.u32 %v2509, 2147483648
        %v2571 = vsel %vm2569, %v2570, %v2568
        %v2572 = vrsqrt.pop %v2511
        %v2573 = vmul.f32 %v2511, %v2572
        %vm2574 = vcmp.eq.f32.partialorder %v2511, inf
        %v2575 = vsel %vm2574, %v2511, %v2573
        %vm2576 = vcmp.eq.f32.partialorder %v2511, 0.0
        %v2577 = vand.u32 %v2511, 2147483648
        %v2578 = vsel %vm2576, %v2577, %v2575
        %v2579 = vrsqrt.pop %v2513
        %v2580 = vmul.f32 %v2513, %v2579
        %vm2581 = vcmp.eq.f32.partialorder %v2513, inf
        %v2582 = vsel %vm2581, %v2513, %v2580
        %vm2583 = vcmp.eq.f32.partialorder %v2513, 0.0
        %v2584 = vand.u32 %v2513, 2147483648
        %v2585 = vsel %vm2583, %v2584, %v2582
        %v2586 = vrsqrt.pop %v2515
        %v2587 = vmul.f32 %v2515, %v2586
        %vm2588 = vcmp.eq.f32.partialorder %v2515, inf
        %v2589 = vsel %vm2588, %v2515, %v2587
        %vm2590 = vcmp.eq.f32.partialorder %v2515, 0.0
        %v2591 = vand.u32 %v2515, 2147483648
        %v2592 = vsel %vm2590, %v2591, %v2589
        %v2593 = vrsqrt.pop %v2517
        %v2594 = vmul.f32 %v2517, %v2593
        %vm2595 = vcmp.eq.f32.partialorder %v2517, inf
        %v2596 = vsel %vm2595, %v2517, %v2594
        %vm2597 = vcmp.eq.f32.partialorder %v2517, 0.0
        %v2598 = vand.u32 %v2517, 2147483648
        %v2599 = vsel %vm2597, %v2598, %v2596
        %v2600 = vrsqrt.pop %v2519
        %v2601 = vmul.f32 %v2519, %v2600
        %vm2602 = vcmp.eq.f32.partialorder %v2519, inf
        %v2603 = vsel %vm2602, %v2519, %v2601
        %vm2604 = vcmp.eq.f32.partialorder %v2519, 0.0
        %v2605 = vand.u32 %v2519, 2147483648
        %v2606 = vsel %vm2604, %v2605, %v2603
        %v2607 = vrsqrt.pop %v2521
        %v2608 = vmul.f32 %v2521, %v2607
        %vm2609 = vcmp.eq.f32.partialorder %v2521, inf
        %v2610 = vsel %vm2609, %v2521, %v2608
        %vm2611 = vcmp.eq.f32.partialorder %v2521, 0.0
        %v2612 = vand.u32 %v2521, 2147483648
        %v2613 = vsel %vm2611, %v2612, %v2610
        %v2614 = vrsqrt.pop %v2523
        %v2615 = vmul.f32 %v2523, %v2614
        %vm2616 = vcmp.eq.f32.partialorder %v2523, inf
        %v2617 = vsel %vm2616, %v2523, %v2615
        %vm2618 = vcmp.eq.f32.partialorder %v2523, 0.0
        %v2619 = vand.u32 %v2523, 2147483648
        %v2620 = vsel %vm2618, %v2619, %v2617
        %v2621 = vrsqrt.pop %v2525
        %v2622 = vmul.f32 %v2525, %v2621
        %vm2623 = vcmp.eq.f32.partialorder %v2525, inf
        %v2624 = vsel %vm2623, %v2525, %v2622
        %vm2625 = vcmp.eq.f32.partialorder %v2525, 0.0
        %v2626 = vand.u32 %v2525, 2147483648
        %v2627 = vsel %vm2625, %v2626, %v2624
        %v2628 = vrsqrt.pop %v2527
        %v2629 = vmul.f32 %v2527, %v2628
        %vm2630 = vcmp.eq.f32.partialorder %v2527, inf
        %v2631 = vsel %vm2630, %v2527, %v2629
        %vm2632 = vcmp.eq.f32.partialorder %v2527, 0.0
        %v2633 = vand.u32 %v2527, 2147483648
        %v2634 = vsel %vm2632, %v2633, %v2631
        %v2635 = vrsqrt.pop %v2529
        %v2636 = vmul.f32 %v2529, %v2635
        %vm2637 = vcmp.eq.f32.partialorder %v2529, inf
        %v2638 = vsel %vm2637, %v2529, %v2636
        %vm2639 = vcmp.eq.f32.partialorder %v2529, 0.0
        %v2640 = vand.u32 %v2529, 2147483648
        %v2641 = vsel %vm2639, %v2640, %v2638
        %v2642 = vmul.f32 %v2536, 0.088388346
        %v2643 = vmul.f32 %v2543, 0.088388346
        %v2644 = vmul.f32 %v2550, 0.088388346
        %v2645 = vmul.f32 %v2557, 0.088388346
        %v2646 = vmul.f32 %v2564, 0.088388346
        %v2647 = vmul.f32 %v2571, 0.088388346
        %v2648 = vmul.f32 %v2578, 0.088388346
        %v2649 = vmul.f32 %v2585, 0.088388346
        %v2650 = vmul.f32 %v2592, 0.088388346
        %v2651 = vmul.f32 %v2599, 0.088388346
        %v2652 = vmul.f32 %v2606, 0.088388346
        %v2653 = vmul.f32 %v2613, 0.088388346
        %v2654 = vmul.f32 %v2620, 0.088388346
        %v2655 = vmul.f32 %v2627, 0.088388346
        %v2656 = vmul.f32 %v2634, 0.088388346
        %v2657 = vmul.f32 %v2641, 0.088388346
        %v2658 = vmul.f32 %v2642, %v2399
        %v2659 = vmul.f32 %v2643, %v2401
        %v2660 = vmul.f32 %v2644, %v2403
        %v2661 = vmul.f32 %v2645, %v2405
        %v2662 = vmul.f32 %v2646, %v2407
        %v2663 = vmul.f32 %v2647, %v2409
        %v2664 = vmul.f32 %v2648, %v2411
        %v2665 = vmul.f32 %v2649, %v2413
        %v2666 = vmul.f32 %v2650, %v2415
        %v2667 = vmul.f32 %v2651, %v2417
        %v2668 = vmul.f32 %v2652, %v2419
        %v2669 = vmul.f32 %v2653, %v2421
        %v2670 = vmul.f32 %v2654, %v2423
        %v2671 = vmul.f32 %v2655, %v2425
        %v2672 = vmul.f32 %v2656, %v2427
        %v2673 = vmul.f32 %v2657, %v2429
        %2674 = vxpose.xlu0.b32.start [1/16] %v2658, 128
        %2675 = vxpose.xlu0.b32.cont [2/16] %v2659, 128
        %2676 = vxpose.xlu0.b32.cont [3/16] %v2660, 128
        %2677 = vxpose.xlu0.b32.cont [4/16] %v2661, 128
        %2678 = vxpose.xlu0.b32.cont [5/16] %v2662, 128
        %2679 = vxpose.xlu0.b32.cont [6/16] %v2663, 128
        %2680 = vxpose.xlu0.b32.cont [7/16] %v2664, 128
        %2681 = vxpose.xlu0.b32.cont [8/16] %v2665, 128
        %2682 = vxpose.xlu0.b32.cont [9/16] %v2666, 128
        %2683 = vxpose.xlu0.b32.cont [10/16] %v2667, 128
        %2684 = vxpose.xlu0.b32.cont [11/16] %v2668, 128
        %2685 = vxpose.xlu0.b32.cont [12/16] %v2669, 128
        %2686 = vxpose.xlu0.b32.cont [13/16] %v2670, 128
        %2687 = vxpose.xlu0.b32.cont [14/16] %v2671, 128
        %2688 = vxpose.xlu0.b32.cont [15/16] %v2672, 128
        %2689 = vxpose.xlu0.b32.end [16/16] %v2673, 128
        %v2690 = vpop.trf.xlu0
        %v2691 = vpop.trf.xlu0
        %v2692 = vpop.trf.xlu0
        %v2693 = vpop.trf.xlu0
        %v2694 = vpop.trf.xlu0
        %v2695 = vpop.trf.xlu0
        %v2696 = vpop.trf.xlu0
        %v2697 = vpop.trf.xlu0
        %v2698 = vpop.trf.xlu0
        %v2699 = vpop.trf.xlu0
        %v2700 = vpop.trf.xlu0
        %v2701 = vpop.trf.xlu0
        %v2702 = vpop.trf.xlu0
        %v2703 = vpop.trf.xlu0
        %v2704 = vpop.trf.xlu0
        %v2705 = vpop.trf.xlu0
        %v2707 = vrot.slane %v2690, 7
        %vm2709 = vcmask 1040384
        %v2710 = vsel %vm2709, %v1773, %v2707
        %2711 = vst [vmem:[%s134] sm:$0x3] %v2710
        %s2712 = sand.u32 %s52, 1
        %s2713 = scalar_lea.sflag [#allocation4], %s2712
        %s2714 = sand.u32 %s52, 1
        %s2715 = smul.addr %s2714, 2
        %s2716 = scalar_lea.vmem [#allocation5], %s2715
        // Predicated region
        $region29: #{tpu_custom_call.1} parent=23 // pred_check
          %p2717 = pneg %p62
        $region30: #{tpu_custom_call.1} parent=23 // pred_check_branch
          %2719 = sbr.rel (%p2717) target = $region32
        $region31: #{tpu_custom_call.1} parent=23 // pred_region
          %s2721 = ssub.s32 32, 32
          %2722 = vsyncadd %s2713, %s2721
          %s2723 = smul.addr %s18, 32
          %s2724 = scalar_lea.hbm %s1, %s2723
          %s2726 = sshll.u32 %s2716, 4
          %s2727 = int_to_ptr.vmem [resolvable:$true] %s2726
          %2729 = dma.vmem_to_hbm [thread:$0]  %s2727, 32, %s2724, %s2713
        $region32: #{tpu_custom_call.1} parent=23 // pred_fallthru
          _
      $region24: #{tpu_custom_call.1} parent=5 // pred_fallthru
        _
      %p2730 = scmp.le.s32.totalorder 2, %s13
      // Predicated region
      $region33: #{tpu_custom_call.1} parent=5 // pred_check
        %p2731 = pneg %p2730
      $region34: #{tpu_custom_call.1} parent=5 // pred_check_branch
        %2733 = sbr.rel (%p2731) target = $region36
      $region35: #{tpu_custom_call.1} parent=5 // pred_region
        %s2734 = ssub.s32 %s13, 2
        // Predicated region
        $region37: #{tpu_custom_call.1} parent=35 // pred_check
          %p2735 = pneg %p68
        $region38: #{tpu_custom_call.1} parent=35 // pred_check_branch
          %2737 = sbr.rel (%p2735) target = $region40
        $region39: #{tpu_custom_call.1} parent=35 // pred_region
          %s2738 = sand.u32 %s53, 1
          %s2739 = scalar_lea.sflag [#allocation4], %s2738
          %s2740 = sand.u32 %s53, 1
          %s2741 = smul.addr %s2740, 2
          %s2742 = scalar_lea.vmem [#allocation5], %s2741
          %2743 = dma.done %s2739, 32
        $region40: #{tpu_custom_call.1} parent=35 // pred_fallthru
          _
      $region36: #{tpu_custom_call.1} parent=5 // pred_fallthru
        _
    $region6: #{tpu_custom_call.1} parent=1 // loop_footer
      %s17 = sadd.s32 1, %s13
    $region7: #{tpu_custom_call.1} parent=1 // loop_footer_branch
      %12 = sbr.rel target = $region3
    $region8: #{tpu_custom_call.1} parent=1 // loop_exit
      _
    %2744 = vsyncpa [#allocation3], 1
    %s2745 = scalar_lea.sflag [#allocation3], 1
    %2746 = vsyncpa %s2745, 1
    %2747 = vsyncpa [#allocation4], 1
    %s2748 = scalar_lea.sflag [#allocation4], 1
    %2749 = vsyncpa %s2748, 1

</llo_original>
